<compile_context>
chip_gen: v6e
topology: v6e:2x2x1
jax: 0.10.0
libtpu: 0.0.40
codegen_flags: <defaults>
</compile_context>

<pallas_src>
import math
from functools import partial

import jax
import jax.numpy as jnp
from jax.experimental import pallas as pl
from jax.experimental.pallas import tpu as pltpu

# ----------------------------- config -----------------------------
N_LAYERS = 2
N_HEADS = 2
HIDDEN = 32          # small shape consistent with the module (divisible by n_heads)
INNER = 64
BATCH = 2
SEQ = 8
LN_EPS = 1e-12
SQRT2 = math.sqrt(2.0)

LANES = 128
# parameter-slab row layout (per layer, every row is 128 lanes wide)
ROW_LN_KV = 0        # [g_key | b_key | g_val | b_val]          (4 x HIDDEN)
ROW_LN_FF = 1        # [g_ff  | b_ff  | bo_new | b2]            (4 x HIDDEN)
ROW_BPROJ = 2        # [bq    | bk    | 0      | 0 ]            (projection bias)
ROW_B1 = 3           # [b1 (INNER) | 0]
OFF_WBLK = 4                     # 2*HIDDEN rows: [[wq|wk|0],[0|0|Wvo_0|Wvo_1]]
OFF_W1 = OFF_WBLK + 2 * HIDDEN   # HIDDEN rows:  [w1_t | 0]
OFF_W2 = OFF_W1 + HIDDEN         # INNER rows:   [w2_t | 0]
P_ROWS = 168                     # >= OFF_W2 + INNER (=164), padded to a multiple of 8

ACT_ROWS = BATCH * SEQ + SEQ     # rows 0:16 = [key | hidden], rows 16:24 = mask


# ----------------------------- kernel -----------------------------
def _layer_norm(x, gamma, beta, eps):
    mu = jnp.mean(x, axis=-1, keepdims=True)
    xc = x - mu
    var = jnp.mean(xc * xc, axis=-1, keepdims=True)
    return xc * jax.lax.rsqrt(var + eps) * gamma + beta


def nova_encoder_kernel(
    act_ref, par_ref, out_ref,
    *, n_layers, n_heads, batch, seq, hidden, inner, eps,
):
    H = hidden
    nh = n_heads
    dh = H // nh
    scale = 1.0 / math.sqrt(dh)
    bs = batch * seq

    x_key = act_ref[0:bs, 0:H]            # constant across layers (matches PyTorch forward)
    hid = act_ref[0:bs, H:2 * H]          # flows through the layers
    mask = act_ref[bs:bs + seq, 0:seq]    # (S, S) additive float attention mask

    for l in range(n_layers):             # static unroll over the fused layers
        r0 = par_ref[l, ROW_LN_KV:ROW_LN_KV + 1, :]     # (1, 128)
        r1 = par_ref[l, ROW_LN_FF:ROW_LN_FF + 1, :]     # (1, 128)
        b_proj = par_ref[l, ROW_BPROJ:ROW_BPROJ + 1, :] # (1, 128) [bq|bk|0|0]
        b1 = par_ref[l, ROW_B1:ROW_B1 + 1, 0:inner]     # (1, INNER)
        w_top = par_ref[l, OFF_WBLK:OFF_WBLK + H, :]            # (H, 128) [wq|wk|0]
        w_bot = par_ref[l, OFF_WBLK + H:OFF_WBLK + 2 * H, :]    # (H, 128) [0|0|Wvo]
        w1 = par_ref[l, OFF_W1:OFF_W1 + H, 0:inner]             # (H, INNER)
        w2 = par_ref[l, OFF_W2:OFF_W2 + inner, 0:H]             # (INNER, H)

        # pre-LayerNorms
        k_ln = _layer_norm(x_key, r0[:, 0:H], r0[:, H:2 * H], eps)
        h_ln = _layer_norm(hid, r0[:, 2 * H:3 * H], r0[:, 3 * H:4 * H], eps)

        # single lane-dense (bs, 128) projection result: [ q | k | vfold_h0 | vfold_h1 ]
        # (Wv @ Wo folded at pack time; the whole MXU work of attention happens here,
        #  before and independent of the softmax path)
        proj = (jnp.dot(k_ln, w_top, preferred_element_type=jnp.float32)
                + jnp.dot(h_ln, w_bot, preferred_element_type=jnp.float32)
                + b_proj)

        q3 = proj[:, 0:H].reshape(batch, seq, H)
        k3 = proj[:, H:2 * H].reshape(batch, seq, H)
        vf3 = proj[:, 2 * H:2 * H + nh * H].reshape(batch, seq, nh * H)

        # residual (normalized hidden_states) + folded out-proj/value bias
        attn = h_ln + r1[:, 2 * H:3 * H]
        for h in range(nh):                        # static unroll, batched over B
            sl = slice(h * dh, (h + 1) * dh)
            sc = jnp.einsum('bqd,bkd->bqk', q3[:, :, sl], k3[:, :, sl],
                            preferred_element_type=jnp.float32) * scale + mask
            # logits are bounded and exp(-1e9) underflows to exactly 0, so the usual
            # max-subtraction is unnecessary (saves an XLU reduce per head per layer)
            p = jnp.exp(sc)
            p = p / jnp.sum(p, axis=-1, keepdims=True)          # exact softmax denom
            ctx = jnp.einsum('bqk,bkd->bqd', p, vf3[:, :, h * H:(h + 1) * H],
                             preferred_element_type=jnp.float32)
            attn = attn + ctx.reshape(bs, H)

        attn = _layer_norm(attn, r1[:, 0:H], r1[:, H:2 * H], eps)

        # FeedForward: Linear -> exact (erf) GELU -> Linear, + residual
        ff = jnp.dot(attn, w1, preferred_element_type=jnp.float32) + b1
        ff = ff * 0.5 * (1.0 + jax.lax.erf(ff * (1.0 / SQRT2)))
        hid = jnp.dot(ff, w2, preferred_element_type=jnp.float32) \
            + r1[:, 3 * H:4 * H] + attn

    out_ref[...] = hid


# ----------------------------- host-side packing -----------------------------
def pack_params(layer_params):
    """Fold all per-layer parameters into one lane-dense (L, P_ROWS, 128) slab."""
    H, I, nh = HIDDEN, INNER, N_HEADS
    dh = H // nh
    assert 2 * H + nh * H == LANES and 4 * H <= LANES and I <= LANES
    slabs = []
    for p in layer_params:
        s = jnp.zeros((P_ROWS, LANES), jnp.float32)
        # row 0: LN_key / LN_value
        s = s.at[ROW_LN_KV, 0:H].set(p["g_key"])
        s = s.at[ROW_LN_KV, H:2 * H].set(p["b_key"])
        s = s.at[ROW_LN_KV, 2 * H:3 * H].set(p["g_val"])
        s = s.at[ROW_LN_KV, 3 * H:4 * H].set(p["b_val"])
        # row 1: LN_ff, folded out-proj bias, FFN output bias
        bo_new = p["bo"] + p["bv"] @ p["wo_t"]          # fold value-bias through Wo
        s = s.at[ROW_LN_FF, 0:H].set(p["g_ff"])
        s = s.at[ROW_LN_FF, H:2 * H].set(p["b_ff"])
        s = s.at[ROW_LN_FF, 2 * H:3 * H].set(bo_new)
        s = s.at[ROW_LN_FF, 3 * H:4 * H].set(p["b2"])
        # row 2: projection bias [bq | bk | 0 | 0]
        s = s.at[ROW_BPROJ, 0:H].set(p["bq"])
        s = s.at[ROW_BPROJ, H:2 * H].set(p["bk"])
        # row 3: FFN hidden bias
        s = s.at[ROW_B1, 0:I].set(p["b1"])
        # W_top rows: [wq_t | wk_t | 0]
        s = s.at[OFF_WBLK:OFF_WBLK + H, 0:H].set(p["wq_t"])
        s = s.at[OFF_WBLK:OFF_WBLK + H, H:2 * H].set(p["wk_t"])
        # W_bot rows: [0 | 0 | Wvo_0 | Wvo_1], Wvo_h = wv[:, head h] @ wo[head h, :]
        for h in range(nh):
            wvo_h = p["wv_t"][:, h * dh:(h + 1) * dh] @ p["wo_t"][h * dh:(h + 1) * dh, :]
            s = s.at[OFF_WBLK + H:OFF_WBLK + 2 * H,
                     2 * H + h * H:2 * H + (h + 1) * H].set(wvo_h)
        # FFN weights
        s = s.at[OFF_W1:OFF_W1 + H, 0:I].set(p["w1_t"])
        s = s.at[OFF_W2:OFF_W2 + I, 0:H].set(p["w2_t"])
        slabs.append(s)
    return jnp.stack(slabs)


def pack_activations(key, hidden_states, mask):
    B, S, H = key.shape
    bs = B * S
    a = jnp.zeros((ACT_ROWS, LANES), jnp.float32)
    a = a.at[0:bs, 0:H].set(key.reshape(bs, H))
    a = a.at[0:bs, H:2 * H].set(hidden_states.reshape(bs, H))
    a = a.at[bs:bs + S, 0:S].set(mask)
    return a


# ----------------------------- wrapper -----------------------------
def nova_encoder_pallas(key, hidden_states, mask, param_slab):
    B, S, H = key.shape
    act = pack_activations(key, hidden_states, mask)

    kernel = partial(nova_encoder_kernel, n_layers=N_LAYERS, n_heads=N_HEADS,
                     batch=B, seq=S, hidden=H, inner=INNER, eps=LN_EPS)

    out = pl.pallas_call(
        kernel,
        out_shape=jax.ShapeDtypeStruct((B * S, H), jnp.float32),
        grid_spec=pltpu.PrefetchScalarGridSpec(
            num_scalar_prefetch=0,
            grid=(1,),                                   # single step: no pipelining overhead
            in_specs=[
                pl.BlockSpec(act.shape, lambda i: (0, 0)),
                pl.BlockSpec(param_slab.shape, lambda i: (0, 0, 0)),
            ],
            out_specs=pl.BlockSpec((B * S, H), lambda i: (0, 0)),
        ),
        compiler_params=pltpu.CompilerParams(dimension_semantics=("arbitrary",)),
        cost_estimate=pl.CostEstimate(
            flops=900_000, transcendentals=4_096,
            bytes_accessed=(act.size + param_slab.size + B * S * H) * 4),
    )(act, param_slab)
    return out.reshape(B, S, H)


# ----------------------------- parameter construction -----------------------------
def make_layer_params(rng):
    keys = jax.random.split(rng, 16)
    s = 0.05
    return {
        "g_key": 1.0 + s * jax.random.normal(keys[0], (HIDDEN,), jnp.float32),
        "b_key": s * jax.random.normal(keys[1], (HIDDEN,), jnp.float32),
        "g_val": 1.0 + s * jax.random.normal(keys[2], (HIDDEN,), jnp.float32),
        "b_val": s * jax.random.normal(keys[3], (HIDDEN,), jnp.float32),
        "g_ff": 1.0 + s * jax.random.normal(keys[4], (HIDDEN,), jnp.float32),
        "b_ff": s * jax.random.normal(keys[5], (HIDDEN,), jnp.float32),
        "wq_t": 0.1 * jax.random.normal(keys[6], (HIDDEN, HIDDEN), jnp.float32),
        "wk_t": 0.1 * jax.random.normal(keys[7], (HIDDEN, HIDDEN), jnp.float32),
        "wv_t": 0.1 * jax.random.normal(keys[8], (HIDDEN, HIDDEN), jnp.float32),
        "bq": s * jax.random.normal(keys[9], (HIDDEN,), jnp.float32),
        "bk": s * jax.random.normal(keys[10], (HIDDEN,), jnp.float32),
        "bv": s * jax.random.normal(keys[11], (HIDDEN,), jnp.float32),
        "wo_t": 0.1 * jax.random.normal(keys[12], (HIDDEN, HIDDEN), jnp.float32),
        "bo": s * jax.random.normal(keys[13], (HIDDEN,), jnp.float32),
        "w1_t": 0.1 * jax.random.normal(keys[14], (HIDDEN, INNER), jnp.float32),
        "b1": jnp.zeros((INNER,), jnp.float32),
        "w2_t": 0.1 * jax.random.normal(keys[15], (INNER, HIDDEN), jnp.float32),
        "b2": jnp.zeros((HIDDEN,), jnp.float32),
    }


# ----------------------------- pure-JAX reference (for sanity) -----------------------------
def _ref_layer(key, hid, mask, p):
    def ln(x, g, b):
        mu = x.mean(-1, keepdims=True)
        var = ((x - mu) ** 2).mean(-1, keepdims=True)
        return (x - mu) / jnp.sqrt(var + LN_EPS) * g + b

    k_ln = ln(key, p["g_key"], p["b_key"])
    h_ln = ln(hid, p["g_val"], p["b_val"])
    q = k_ln @ p["wq_t"] + p["bq"]
    k = k_ln @ p["wk_t"] + p["bk"]
    v = h_ln @ p["wv_t"] + p["bv"]
    B, S, H = q.shape
    dh = H // N_HEADS
    qh = q.reshape(B, S, N_HEADS, dh).transpose(0, 2, 1, 3)
    kh = k.reshape(B, S, N_HEADS, dh).transpose(0, 2, 1, 3)
    vh = v.reshape(B, S, N_HEADS, dh).transpose(0, 2, 1, 3)
    s = qh @ kh.transpose(0, 1, 3, 2) / math.sqrt(dh) + mask
    w = jax.nn.softmax(s, axis=-1)
    o = (w @ vh).transpose(0, 2, 1, 3).reshape(B, S, H)
    attn = o @ p["wo_t"] + p["bo"] + h_ln
    attn = ln(attn, p["g_ff"], p["b_ff"])
    h1 = attn @ p["w1_t"] + p["b1"]
    h1 = h1 * 0.5 * (1.0 + jax.lax.erf(h1 / SQRT2))
    return h1 @ p["w2_t"] + p["b2"] + attn


def _ref_encoder(key, hid, mask, layer_params):
    for p in layer_params:
        hid = _ref_layer(key, hid, mask, p)
    return hid


# ----------------------------- main -----------------------------
if __name__ == "__main__":
    root = jax.random.PRNGKey(0)
    k_key, k_hid, k_p0, k_p1 = jax.random.split(root, 4)

    key = jax.random.normal(k_key, (BATCH, SEQ, HIDDEN), jnp.float32)
    hidden_states = jax.random.normal(k_hid, (BATCH, SEQ, HIDDEN), jnp.float32)

    # additive float attn_mask (S, S): block attention to "future" positions
    causal = jnp.triu(jnp.ones((SEQ, SEQ), jnp.float32), k=1)
    attn_mask = causal * (-1e9)

    layer_params = [make_layer_params(k_p0), make_layer_params(k_p1)]
    param_slab = pack_params(layer_params)

    out = nova_encoder_pallas(key, hidden_states, attn_mask, param_slab)
    out = jax.block_until_ready(out)

    ref = _ref_encoder(key, hidden_states, attn_mask, layer_params)
    assert out.shape == (BATCH, SEQ, HIDDEN)
    assert jnp.allclose(out, ref, atol=2e-3, rtol=2e-3), "mismatch vs pure-JAX reference"

    # NOTE: dropout layers (hidden_dropout_prob / attn_dropout_prob) are identity in eval mode.
    print("KERNEL_OK")
</pallas_src>

<mosaic_0001>
module attributes {stable_mosaic.version = 11 : i64} {
  func.func @nova_encoder_kernel(%arg0: i32, %arg1: memref<24x128xf32, #tpu.memory_space<vmem>>, %arg2: memref<2x168x128xf32, #tpu.memory_space<vmem>>, %arg3: memref<16x32xf32, #tpu.memory_space<vmem>>) attributes {dimension_semantics = [#tpu.dimension_semantics<arbitrary>], iteration_bounds = array<i64: 1>, scalar_prefetch = 0 : i64, scratch_operands = 0 : i64, tpu.core_type = #tpu.core_type<tc>, window_params = [{pipeline_mode = #tpu.pipeline_mode<synchronous>, transform_indices = @transform_0, window_bounds = array<i64: 24, 128>}, {pipeline_mode = #tpu.pipeline_mode<synchronous>, transform_indices = @transform_1, window_bounds = array<i64: 2, 168, 128>}, {pipeline_mode = #tpu.pipeline_mode<synchronous>, transform_indices = @transform_2, window_bounds = array<i64: 16, 32>}]} {
    %c0 = arith.constant 0 : index
    %c0_0 = arith.constant 0 : index
    %0 = vector.load %arg1[%c0, %c0_0] : memref<24x128xf32, #tpu.memory_space<vmem>>, vector<16x32xf32>
    %c0_1 = arith.constant 0 : index
    %c32 = arith.constant 32 : index
    %1 = vector.load %arg1[%c0_1, %c32] : memref<24x128xf32, #tpu.memory_space<vmem>>, vector<16x32xf32>
    %c16 = arith.constant 16 : index
    %c0_2 = arith.constant 0 : index
    %2 = vector.load %arg1[%c16, %c0_2] : memref<24x128xf32, #tpu.memory_space<vmem>>, vector<8x8xf32>
    %c0_3 = arith.constant 0 : index
    %c0_4 = arith.constant 0 : index
    %c0_5 = arith.constant 0 : index
    %3 = vector.load %arg2[%c0_3, %c0_4, %c0_5] : memref<2x168x128xf32, #tpu.memory_space<vmem>>, vector<1x1x128xf32>
    %4 = vector.shape_cast %3 : vector<1x1x128xf32> to vector<1x128xf32>
    %c0_6 = arith.constant 0 : index
    %c1 = arith.constant 1 : index
    %c0_7 = arith.constant 0 : index
    %5 = vector.load %arg2[%c0_6, %c1, %c0_7] : memref<2x168x128xf32, #tpu.memory_space<vmem>>, vector<1x1x128xf32>
    %6 = vector.shape_cast %5 : vector<1x1x128xf32> to vector<1x128xf32>
    %c0_8 = arith.constant 0 : index
    %c2 = arith.constant 2 : index
    %c0_9 = arith.constant 0 : index
    %7 = vector.load %arg2[%c0_8, %c2, %c0_9] : memref<2x168x128xf32, #tpu.memory_space<vmem>>, vector<1x1x128xf32>
    %8 = vector.shape_cast %7 : vector<1x1x128xf32> to vector<1x128xf32>
    %c0_10 = arith.constant 0 : index
    %c3 = arith.constant 3 : index
    %c0_11 = arith.constant 0 : index
    %9 = vector.load %arg2[%c0_10, %c3, %c0_11] : memref<2x168x128xf32, #tpu.memory_space<vmem>>, vector<1x1x64xf32>
    %10 = vector.shape_cast %9 : vector<1x1x64xf32> to vector<1x64xf32>
    %c0_12 = arith.constant 0 : index
    %c4 = arith.constant 4 : index
    %c0_13 = arith.constant 0 : index
    %11 = vector.load %arg2[%c0_12, %c4, %c0_13] : memref<2x168x128xf32, #tpu.memory_space<vmem>>, vector<1x32x128xf32>
    %12 = vector.shape_cast %11 : vector<1x32x128xf32> to vector<32x128xf32>
    %c0_14 = arith.constant 0 : index
    %c36 = arith.constant 36 : index
    %c0_15 = arith.constant 0 : index
    %13 = vector.load %arg2[%c0_14, %c36, %c0_15] : memref<2x168x128xf32, #tpu.memory_space<vmem>>, vector<1x32x128xf32>
    %14 = vector.shape_cast %13 : vector<1x32x128xf32> to vector<32x128xf32>
    %c0_16 = arith.constant 0 : index
    %c68 = arith.constant 68 : index
    %c0_17 = arith.constant 0 : index
    %15 = vector.load %arg2[%c0_16, %c68, %c0_17] : memref<2x168x128xf32, #tpu.memory_space<vmem>>, vector<1x32x64xf32>
    %16 = vector.shape_cast %15 : vector<1x32x64xf32> to vector<32x64xf32>
    %c0_18 = arith.constant 0 : index
    %c100 = arith.constant 100 : index
    %c0_19 = arith.constant 0 : index
    %17 = vector.load %arg2[%c0_18, %c100, %c0_19] : memref<2x168x128xf32, #tpu.memory_space<vmem>>, vector<1x64x32xf32>
    %18 = vector.shape_cast %17 : vector<1x64x32xf32> to vector<64x32xf32>
    %19 = vector.extract_strided_slice %4 {offsets = [0, 0], sizes = [1, 32], strides = [1, 1]} : vector<1x128xf32> to vector<1x32xf32>
    %20 = vector.extract_strided_slice %4 {offsets = [0, 32], sizes = [1, 32], strides = [1, 1]} : vector<1x128xf32> to vector<1x32xf32>
    %cst = arith.constant dense<0.000000e+00> : vector<16xf32>
    %21 = vector.multi_reduction <add>, %0, %cst [1] : vector<16x32xf32> to vector<16xf32>
    %22 = vector.shape_cast %21 : vector<16xf32> to vector<16x1xf32>
    %cst_20 = arith.constant 3.200000e+01 : f32
    %23 = vector.broadcast %cst_20 : f32 to vector<16x1xf32>
    %24 = arith.divf %22, %23 : vector<16x1xf32>
    %25 = vector.broadcast %24 : vector<16x1xf32> to vector<16x32xf32>
    %26 = arith.subf %0, %25 : vector<16x32xf32>
    %27 = arith.mulf %26, %26 : vector<16x32xf32>
    %cst_21 = arith.constant dense<0.000000e+00> : vector<16xf32>
    %28 = vector.multi_reduction <add>, %27, %cst_21 [1] : vector<16x32xf32> to vector<16xf32>
    %29 = vector.shape_cast %28 : vector<16xf32> to vector<16x1xf32>
    %cst_22 = arith.constant 3.200000e+01 : f32
    %30 = vector.broadcast %cst_22 : f32 to vector<16x1xf32>
    %31 = arith.divf %29, %30 : vector<16x1xf32>
    %cst_23 = arith.constant 9.99999996E-13 : f32
    %32 = vector.broadcast %cst_23 : f32 to vector<16x1xf32>
    %33 = arith.addf %31, %32 : vector<16x1xf32>
    %34 = math.rsqrt %33 : vector<16x1xf32>
    %35 = vector.broadcast %34 : vector<16x1xf32> to vector<16x32xf32>
    %36 = arith.mulf %26, %35 : vector<16x32xf32>
    %37 = vector.broadcast %19 : vector<1x32xf32> to vector<16x32xf32>
    %38 = arith.mulf %36, %37 : vector<16x32xf32>
    %39 = vector.broadcast %20 : vector<1x32xf32> to vector<16x32xf32>
    %40 = arith.addf %38, %39 : vector<16x32xf32>
    %41 = vector.extract_strided_slice %4 {offsets = [0, 64], sizes = [1, 32], strides = [1, 1]} : vector<1x128xf32> to vector<1x32xf32>
    %42 = vector.extract_strided_slice %4 {offsets = [0, 96], sizes = [1, 32], strides = [1, 1]} : vector<1x128xf32> to vector<1x32xf32>
    %cst_24 = arith.constant dense<0.000000e+00> : vector<16xf32>
    %43 = vector.multi_reduction <add>, %1, %cst_24 [1] : vector<16x32xf32> to vector<16xf32>
    %44 = vector.shape_cast %43 : vector<16xf32> to vector<16x1xf32>
    %cst_25 = arith.constant 3.200000e+01 : f32
    %45 = vector.broadcast %cst_25 : f32 to vector<16x1xf32>
    %46 = arith.divf %44, %45 : vector<16x1xf32>
    %47 = vector.broadcast %46 : vector<16x1xf32> to vector<16x32xf32>
    %48 = arith.subf %1, %47 : vector<16x32xf32>
    %49 = arith.mulf %48, %48 : vector<16x32xf32>
    %cst_26 = arith.constant dense<0.000000e+00> : vector<16xf32>
    %50 = vector.multi_reduction <add>, %49, %cst_26 [1] : vector<16x32xf32> to vector<16xf32>
    %51 = vector.shape_cast %50 : vector<16xf32> to vector<16x1xf32>
    %cst_27 = arith.constant 3.200000e+01 : f32
    %52 = vector.broadcast %cst_27 : f32 to vector<16x1xf32>
    %53 = arith.divf %51, %52 : vector<16x1xf32>
    %cst_28 = arith.constant 9.99999996E-13 : f32
    %54 = vector.broadcast %cst_28 : f32 to vector<16x1xf32>
    %55 = arith.addf %53, %54 : vector<16x1xf32>
    %56 = math.rsqrt %55 : vector<16x1xf32>
    %57 = vector.broadcast %56 : vector<16x1xf32> to vector<16x32xf32>
    %58 = arith.mulf %48, %57 : vector<16x32xf32>
    %59 = vector.broadcast %41 : vector<1x32xf32> to vector<16x32xf32>
    %60 = arith.mulf %58, %59 : vector<16x32xf32>
    %61 = vector.broadcast %42 : vector<1x32xf32> to vector<16x32xf32>
    %62 = arith.addf %60, %61 : vector<16x32xf32>
    %cst_29 = arith.constant dense<0.000000e+00> : vector<16x128xf32>
    %63 = tpu.matmul %40, %12, %cst_29 {dimension_numbers = #tpu.dot_dimension_numbers<[1], [0], [0], [1], [0, 0, 1, 1], [], []>} : vector<16x32xf32>, vector<32x128xf32>, vector<16x128xf32> -> vector<16x128xf32>
    %cst_30 = arith.constant dense<0.000000e+00> : vector<16x128xf32>
    %64 = tpu.matmul %62, %14, %cst_30 {dimension_numbers = #tpu.dot_dimension_numbers<[1], [0], [0], [1], [0, 0, 1, 1], [], []>} : vector<16x32xf32>, vector<32x128xf32>, vector<16x128xf32> -> vector<16x128xf32>
    %65 = arith.addf %63, %64 : vector<16x128xf32>
    %66 = vector.broadcast %8 : vector<1x128xf32> to vector<16x128xf32>
    %67 = arith.addf %65, %66 : vector<16x128xf32>
    %68 = vector.extract_strided_slice %67 {offsets = [0, 0], sizes = [16, 32], strides = [1, 1]} : vector<16x128xf32> to vector<16x32xf32>
    %69 = vector.shape_cast %68 : vector<16x32xf32> to vector<2x8x32xf32>
    %70 = vector.extract_strided_slice %67 {offsets = [0, 32], sizes = [16, 32], strides = [1, 1]} : vector<16x128xf32> to vector<16x32xf32>
    %71 = vector.shape_cast %70 : vector<16x32xf32> to vector<2x8x32xf32>
    %72 = vector.extract_strided_slice %67 {offsets = [0, 64], sizes = [16, 64], strides = [1, 1]} : vector<16x128xf32> to vector<16x64xf32>
    %73 = vector.shape_cast %72 : vector<16x64xf32> to vector<2x8x64xf32>
    %74 = vector.extract_strided_slice %6 {offsets = [0, 64], sizes = [1, 32], strides = [1, 1]} : vector<1x128xf32> to vector<1x32xf32>
    %75 = vector.broadcast %74 : vector<1x32xf32> to vector<16x32xf32>
    %76 = arith.addf %62, %75 : vector<16x32xf32>
    %77 = vector.extract_strided_slice %69 {offsets = [0, 0, 0], sizes = [2, 8, 16], strides = [1, 1, 1]} : vector<2x8x32xf32> to vector<2x8x16xf32>
    %78 = vector.extract_strided_slice %71 {offsets = [0, 0, 0], sizes = [2, 8, 16], strides = [1, 1, 1]} : vector<2x8x32xf32> to vector<2x8x16xf32>
    "tpu.trace_start"() <{level = 10 : i32, message = "bqd,bkd->bqk"}> : () -> ()
    %cst_31 = arith.constant dense<0.000000e+00> : vector<2x8x8xf32>
    %79 = tpu.matmul %77, %78, %cst_31 {dimension_numbers = #tpu.dot_dimension_numbers<[2], [2], [1], [1], [0, 0, 0, 1, 1, 1], [0], [0]>} : vector<2x8x16xf32>, vector<2x8x16xf32>, vector<2x8x8xf32> -> vector<2x8x8xf32>
    "tpu.trace_stop"() : () -> ()
    %cst_32 = arith.constant 2.500000e-01 : f32
    %80 = vector.broadcast %cst_32 : f32 to vector<2x8x8xf32>
    %81 = arith.mulf %79, %80 : vector<2x8x8xf32>
    %82 = vector.shape_cast %2 : vector<8x8xf32> to vector<1x8x8xf32>
    %83 = vector.broadcast %82 : vector<1x8x8xf32> to vector<2x8x8xf32>
    %84 = arith.addf %81, %83 : vector<2x8x8xf32>
    %85 = math.exp %84 : vector<2x8x8xf32>
    %cst_33 = arith.constant dense<0.000000e+00> : vector<2x8xf32>
    %86 = vector.multi_reduction <add>, %85, %cst_33 [2] : vector<2x8x8xf32> to vector<2x8xf32>
    %87 = vector.shape_cast %86 : vector<2x8xf32> to vector<2x8x1xf32>
    %88 = vector.broadcast %87 : vector<2x8x1xf32> to vector<2x8x8xf32>
    %89 = arith.divf %85, %88 : vector<2x8x8xf32>
    %90 = vector.extract_strided_slice %73 {offsets = [0, 0, 0], sizes = [2, 8, 32], strides = [1, 1, 1]} : vector<2x8x64xf32> to vector<2x8x32xf32>
    "tpu.trace_start"() <{level = 10 : i32, message = "bqk,bkd->bqd"}> : () -> ()
    %cst_34 = arith.constant dense<0.000000e+00> : vector<2x8x32xf32>
    %91 = tpu.matmul %89, %90, %cst_34 {dimension_numbers = #tpu.dot_dimension_numbers<[2], [1], [1], [2], [0, 0, 0, 1, 1, 2], [0], [0]>} : vector<2x8x8xf32>, vector<2x8x32xf32>, vector<2x8x32xf32> -> vector<2x8x32xf32>
    "tpu.trace_stop"() : () -> ()
    %92 = vector.shape_cast %91 : vector<2x8x32xf32> to vector<16x32xf32>
    %93 = arith.addf %76, %92 : vector<16x32xf32>
    %94 = vector.extract_strided_slice %69 {offsets = [0, 0, 16], sizes = [2, 8, 16], strides = [1, 1, 1]} : vector<2x8x32xf32> to vector<2x8x16xf32>
    %95 = vector.extract_strided_slice %71 {offsets = [0, 0, 16], sizes = [2, 8, 16], strides = [1, 1, 1]} : vector<2x8x32xf32> to vector<2x8x16xf32>
    "tpu.trace_start"() <{level = 10 : i32, message = "bqd,bkd->bqk"}> : () -> ()
    %cst_35 = arith.constant dense<0.000000e+00> : vector<2x8x8xf32>
    %96 = tpu.matmul %94, %95, %cst_35 {dimension_numbers = #tpu.dot_dimension_numbers<[2], [2], [1], [1], [0, 0, 0, 1, 1, 1], [0], [0]>} : vector<2x8x16xf32>, vector<2x8x16xf32>, vector<2x8x8xf32> -> vector<2x8x8xf32>
    "tpu.trace_stop"() : () -> ()
    %cst_36 = arith.constant 2.500000e-01 : f32
    %97 = vector.broadcast %cst_36 : f32 to vector<2x8x8xf32>
    %98 = arith.mulf %96, %97 : vector<2x8x8xf32>
    %99 = vector.shape_cast %2 : vector<8x8xf32> to vector<1x8x8xf32>
    %100 = vector.broadcast %99 : vector<1x8x8xf32> to vector<2x8x8xf32>
    %101 = arith.addf %98, %100 : vector<2x8x8xf32>
    %102 = math.exp %101 : vector<2x8x8xf32>
    %cst_37 = arith.constant dense<0.000000e+00> : vector<2x8xf32>
    %103 = vector.multi_reduction <add>, %102, %cst_37 [2] : vector<2x8x8xf32> to vector<2x8xf32>
    %104 = vector.shape_cast %103 : vector<2x8xf32> to vector<2x8x1xf32>
    %105 = vector.broadcast %104 : vector<2x8x1xf32> to vector<2x8x8xf32>
    %106 = arith.divf %102, %105 : vector<2x8x8xf32>
    %107 = vector.extract_strided_slice %73 {offsets = [0, 0, 32], sizes = [2, 8, 32], strides = [1, 1, 1]} : vector<2x8x64xf32> to vector<2x8x32xf32>
    "tpu.trace_start"() <{level = 10 : i32, message = "bqk,bkd->bqd"}> : () -> ()
    %cst_38 = arith.constant dense<0.000000e+00> : vector<2x8x32xf32>
    %108 = tpu.matmul %106, %107, %cst_38 {dimension_numbers = #tpu.dot_dimension_numbers<[2], [1], [1], [2], [0, 0, 0, 1, 1, 2], [0], [0]>} : vector<2x8x8xf32>, vector<2x8x32xf32>, vector<2x8x32xf32> -> vector<2x8x32xf32>
    "tpu.trace_stop"() : () -> ()
    %109 = vector.shape_cast %108 : vector<2x8x32xf32> to vector<16x32xf32>
    %110 = arith.addf %93, %109 : vector<16x32xf32>
    %111 = vector.extract_strided_slice %6 {offsets = [0, 0], sizes = [1, 32], strides = [1, 1]} : vector<1x128xf32> to vector<1x32xf32>
    %112 = vector.extract_strided_slice %6 {offsets = [0, 32], sizes = [1, 32], strides = [1, 1]} : vector<1x128xf32> to vector<1x32xf32>
    %cst_39 = arith.constant dense<0.000000e+00> : vector<16xf32>
    %113 = vector.multi_reduction <add>, %110, %cst_39 [1] : vector<16x32xf32> to vector<16xf32>
    %114 = vector.shape_cast %113 : vector<16xf32> to vector<16x1xf32>
    %cst_40 = arith.constant 3.200000e+01 : f32
    %115 = vector.broadcast %cst_40 : f32 to vector<16x1xf32>
    %116 = arith.divf %114, %115 : vector<16x1xf32>
    %117 = vector.broadcast %116 : vector<16x1xf32> to vector<16x32xf32>
    %118 = arith.subf %110, %117 : vector<16x32xf32>
    %119 = arith.mulf %118, %118 : vector<16x32xf32>
    %cst_41 = arith.constant dense<0.000000e+00> : vector<16xf32>
    %120 = vector.multi_reduction <add>, %119, %cst_41 [1] : vector<16x32xf32> to vector<16xf32>
    %121 = vector.shape_cast %120 : vector<16xf32> to vector<16x1xf32>
    %cst_42 = arith.constant 3.200000e+01 : f32
    %122 = vector.broadcast %cst_42 : f32 to vector<16x1xf32>
    %123 = arith.divf %121, %122 : vector<16x1xf32>
    %cst_43 = arith.constant 9.99999996E-13 : f32
    %124 = vector.broadcast %cst_43 : f32 to vector<16x1xf32>
    %125 = arith.addf %123, %124 : vector<16x1xf32>
    %126 = math.rsqrt %125 : vector<16x1xf32>
    %127 = vector.broadcast %126 : vector<16x1xf32> to vector<16x32xf32>
    %128 = arith.mulf %118, %127 : vector<16x32xf32>
    %129 = vector.broadcast %111 : vector<1x32xf32> to vector<16x32xf32>
    %130 = arith.mulf %128, %129 : vector<16x32xf32>
    %131 = vector.broadcast %112 : vector<1x32xf32> to vector<16x32xf32>
    %132 = arith.addf %130, %131 : vector<16x32xf32>
    %cst_44 = arith.constant dense<0.000000e+00> : vector<16x64xf32>
    %133 = tpu.matmul %132, %16, %cst_44 {dimension_numbers = #tpu.dot_dimension_numbers<[1], [0], [0], [1], [0, 0, 1, 1], [], []>} : vector<16x32xf32>, vector<32x64xf32>, vector<16x64xf32> -> vector<16x64xf32>
    %134 = vector.broadcast %10 : vector<1x64xf32> to vector<16x64xf32>
    %135 = arith.addf %133, %134 : vector<16x64xf32>
    %cst_45 = arith.constant 5.000000e-01 : f32
    %136 = vector.broadcast %cst_45 : f32 to vector<16x64xf32>
    %137 = arith.mulf %135, %136 : vector<16x64xf32>
    %cst_46 = arith.constant 0.707106769 : f32
    %138 = vector.broadcast %cst_46 : f32 to vector<16x64xf32>
    %139 = arith.mulf %135, %138 : vector<16x64xf32>
    %140 = math.erf %139 : vector<16x64xf32>
    %cst_47 = arith.constant 1.000000e+00 : f32
    %141 = vector.broadcast %cst_47 : f32 to vector<16x64xf32>
    %142 = arith.addf %141, %140 : vector<16x64xf32>
    %143 = arith.mulf %137, %142 : vector<16x64xf32>
    %cst_48 = arith.constant dense<0.000000e+00> : vector<16x32xf32>
    %144 = tpu.matmul %143, %18, %cst_48 {dimension_numbers = #tpu.dot_dimension_numbers<[1], [0], [0], [1], [0, 0, 1, 1], [], []>} : vector<16x64xf32>, vector<64x32xf32>, vector<16x32xf32> -> vector<16x32xf32>
    %145 = vector.extract_strided_slice %6 {offsets = [0, 96], sizes = [1, 32], strides = [1, 1]} : vector<1x128xf32> to vector<1x32xf32>
    %146 = vector.broadcast %145 : vector<1x32xf32> to vector<16x32xf32>
    %147 = arith.addf %144, %146 : vector<16x32xf32>
    %148 = arith.addf %147, %132 : vector<16x32xf32>
    %c1_49 = arith.constant 1 : index
    %c0_50 = arith.constant 0 : index
    %c0_51 = arith.constant 0 : index
    %149 = vector.load %arg2[%c1_49, %c0_50, %c0_51] : memref<2x168x128xf32, #tpu.memory_space<vmem>>, vector<1x1x128xf32>
    %150 = vector.shape_cast %149 : vector<1x1x128xf32> to vector<1x128xf32>
    %c1_52 = arith.constant 1 : index
    %c1_53 = arith.constant 1 : index
    %c0_54 = arith.constant 0 : index
    %151 = vector.load %arg2[%c1_52, %c1_53, %c0_54] : memref<2x168x128xf32, #tpu.memory_space<vmem>>, vector<1x1x128xf32>
    %152 = vector.shape_cast %151 : vector<1x1x128xf32> to vector<1x128xf32>
    %c1_55 = arith.constant 1 : index
    %c2_56 = arith.constant 2 : index
    %c0_57 = arith.constant 0 : index
    %153 = vector.load %arg2[%c1_55, %c2_56, %c0_57] : memref<2x168x128xf32, #tpu.memory_space<vmem>>, vector<1x1x128xf32>
    %154 = vector.shape_cast %153 : vector<1x1x128xf32> to vector<1x128xf32>
    %c1_58 = arith.constant 1 : index
    %c3_59 = arith.constant 3 : index
    %c0_60 = arith.constant 0 : index
    %155 = vector.load %arg2[%c1_58, %c3_59, %c0_60] : memref<2x168x128xf32, #tpu.memory_space<vmem>>, vector<1x1x64xf32>
    %156 = vector.shape_cast %155 : vector<1x1x64xf32> to vector<1x64xf32>
    %c1_61 = arith.constant 1 : index
    %c4_62 = arith.constant 4 : index
    %c0_63 = arith.constant 0 : index
    %157 = vector.load %arg2[%c1_61, %c4_62, %c0_63] : memref<2x168x128xf32, #tpu.memory_space<vmem>>, vector<1x32x128xf32>
    %158 = vector.shape_cast %157 : vector<1x32x128xf32> to vector<32x128xf32>
    %c1_64 = arith.constant 1 : index
    %c36_65 = arith.constant 36 : index
    %c0_66 = arith.constant 0 : index
    %159 = vector.load %arg2[%c1_64, %c36_65, %c0_66] : memref<2x168x128xf32, #tpu.memory_space<vmem>>, vector<1x32x128xf32>
    %160 = vector.shape_cast %159 : vector<1x32x128xf32> to vector<32x128xf32>
    %c1_67 = arith.constant 1 : index
    %c68_68 = arith.constant 68 : index
    %c0_69 = arith.constant 0 : index
    %161 = vector.load %arg2[%c1_67, %c68_68, %c0_69] : memref<2x168x128xf32, #tpu.memory_space<vmem>>, vector<1x32x64xf32>
    %162 = vector.shape_cast %161 : vector<1x32x64xf32> to vector<32x64xf32>
    %c1_70 = arith.constant 1 : index
    %c100_71 = arith.constant 100 : index
    %c0_72 = arith.constant 0 : index
    %163 = vector.load %arg2[%c1_70, %c100_71, %c0_72] : memref<2x168x128xf32, #tpu.memory_space<vmem>>, vector<1x64x32xf32>
    %164 = vector.shape_cast %163 : vector<1x64x32xf32> to vector<64x32xf32>
    %165 = vector.extract_strided_slice %150 {offsets = [0, 0], sizes = [1, 32], strides = [1, 1]} : vector<1x128xf32> to vector<1x32xf32>
    %166 = vector.extract_strided_slice %150 {offsets = [0, 32], sizes = [1, 32], strides = [1, 1]} : vector<1x128xf32> to vector<1x32xf32>
    %cst_73 = arith.constant dense<0.000000e+00> : vector<16xf32>
    %167 = vector.multi_reduction <add>, %0, %cst_73 [1] : vector<16x32xf32> to vector<16xf32>
    %168 = vector.shape_cast %167 : vector<16xf32> to vector<16x1xf32>
    %cst_74 = arith.constant 3.200000e+01 : f32
    %169 = vector.broadcast %cst_74 : f32 to vector<16x1xf32>
    %170 = arith.divf %168, %169 : vector<16x1xf32>
    %171 = vector.broadcast %170 : vector<16x1xf32> to vector<16x32xf32>
    %172 = arith.subf %0, %171 : vector<16x32xf32>
    %173 = arith.mulf %172, %172 : vector<16x32xf32>
    %cst_75 = arith.constant dense<0.000000e+00> : vector<16xf32>
    %174 = vector.multi_reduction <add>, %173, %cst_75 [1] : vector<16x32xf32> to vector<16xf32>
    %175 = vector.shape_cast %174 : vector<16xf32> to vector<16x1xf32>
    %cst_76 = arith.constant 3.200000e+01 : f32
    %176 = vector.broadcast %cst_76 : f32 to vector<16x1xf32>
    %177 = arith.divf %175, %176 : vector<16x1xf32>
    %cst_77 = arith.constant 9.99999996E-13 : f32
    %178 = vector.broadcast %cst_77 : f32 to vector<16x1xf32>
    %179 = arith.addf %177, %178 : vector<16x1xf32>
    %180 = math.rsqrt %179 : vector<16x1xf32>
    %181 = vector.broadcast %180 : vector<16x1xf32> to vector<16x32xf32>
    %182 = arith.mulf %172, %181 : vector<16x32xf32>
    %183 = vector.broadcast %165 : vector<1x32xf32> to vector<16x32xf32>
    %184 = arith.mulf %182, %183 : vector<16x32xf32>
    %185 = vector.broadcast %166 : vector<1x32xf32> to vector<16x32xf32>
    %186 = arith.addf %184, %185 : vector<16x32xf32>
    %187 = vector.extract_strided_slice %150 {offsets = [0, 64], sizes = [1, 32], strides = [1, 1]} : vector<1x128xf32> to vector<1x32xf32>
    %188 = vector.extract_strided_slice %150 {offsets = [0, 96], sizes = [1, 32], strides = [1, 1]} : vector<1x128xf32> to vector<1x32xf32>
    %cst_78 = arith.constant dense<0.000000e+00> : vector<16xf32>
    %189 = vector.multi_reduction <add>, %148, %cst_78 [1] : vector<16x32xf32> to vector<16xf32>
    %190 = vector.shape_cast %189 : vector<16xf32> to vector<16x1xf32>
    %cst_79 = arith.constant 3.200000e+01 : f32
    %191 = vector.broadcast %cst_79 : f32 to vector<16x1xf32>
    %192 = arith.divf %190, %191 : vector<16x1xf32>
    %193 = vector.broadcast %192 : vector<16x1xf32> to vector<16x32xf32>
    %194 = arith.subf %148, %193 : vector<16x32xf32>
    %195 = arith.mulf %194, %194 : vector<16x32xf32>
    %cst_80 = arith.constant dense<0.000000e+00> : vector<16xf32>
    %196 = vector.multi_reduction <add>, %195, %cst_80 [1] : vector<16x32xf32> to vector<16xf32>
    %197 = vector.shape_cast %196 : vector<16xf32> to vector<16x1xf32>
    %cst_81 = arith.constant 3.200000e+01 : f32
    %198 = vector.broadcast %cst_81 : f32 to vector<16x1xf32>
    %199 = arith.divf %197, %198 : vector<16x1xf32>
    %cst_82 = arith.constant 9.99999996E-13 : f32
    %200 = vector.broadcast %cst_82 : f32 to vector<16x1xf32>
    %201 = arith.addf %199, %200 : vector<16x1xf32>
    %202 = math.rsqrt %201 : vector<16x1xf32>
    %203 = vector.broadcast %202 : vector<16x1xf32> to vector<16x32xf32>
    %204 = arith.mulf %194, %203 : vector<16x32xf32>
    %205 = vector.broadcast %187 : vector<1x32xf32> to vector<16x32xf32>
    %206 = arith.mulf %204, %205 : vector<16x32xf32>
    %207 = vector.broadcast %188 : vector<1x32xf32> to vector<16x32xf32>
    %208 = arith.addf %206, %207 : vector<16x32xf32>
    %cst_83 = arith.constant dense<0.000000e+00> : vector<16x128xf32>
    %209 = tpu.matmul %186, %158, %cst_83 {dimension_numbers = #tpu.dot_dimension_numbers<[1], [0], [0], [1], [0, 0, 1, 1], [], []>} : vector<16x32xf32>, vector<32x128xf32>, vector<16x128xf32> -> vector<16x128xf32>
    %cst_84 = arith.constant dense<0.000000e+00> : vector<16x128xf32>
    %210 = tpu.matmul %208, %160, %cst_84 {dimension_numbers = #tpu.dot_dimension_numbers<[1], [0], [0], [1], [0, 0, 1, 1], [], []>} : vector<16x32xf32>, vector<32x128xf32>, vector<16x128xf32> -> vector<16x128xf32>
    %211 = arith.addf %209, %210 : vector<16x128xf32>
    %212 = vector.broadcast %154 : vector<1x128xf32> to vector<16x128xf32>
    %213 = arith.addf %211, %212 : vector<16x128xf32>
    %214 = vector.extract_strided_slice %213 {offsets = [0, 0], sizes = [16, 32], strides = [1, 1]} : vector<16x128xf32> to vector<16x32xf32>
    %215 = vector.shape_cast %214 : vector<16x32xf32> to vector<2x8x32xf32>
    %216 = vector.extract_strided_slice %213 {offsets = [0, 32], sizes = [16, 32], strides = [1, 1]} : vector<16x128xf32> to vector<16x32xf32>
    %217 = vector.shape_cast %216 : vector<16x32xf32> to vector<2x8x32xf32>
    %218 = vector.extract_strided_slice %213 {offsets = [0, 64], sizes = [16, 64], strides = [1, 1]} : vector<16x128xf32> to vector<16x64xf32>
    %219 = vector.shape_cast %218 : vector<16x64xf32> to vector<2x8x64xf32>
    %220 = vector.extract_strided_slice %152 {offsets = [0, 64], sizes = [1, 32], strides = [1, 1]} : vector<1x128xf32> to vector<1x32xf32>
    %221 = vector.broadcast %220 : vector<1x32xf32> to vector<16x32xf32>
    %222 = arith.addf %208, %221 : vector<16x32xf32>
    %223 = vector.extract_strided_slice %215 {offsets = [0, 0, 0], sizes = [2, 8, 16], strides = [1, 1, 1]} : vector<2x8x32xf32> to vector<2x8x16xf32>
    %224 = vector.extract_strided_slice %217 {offsets = [0, 0, 0], sizes = [2, 8, 16], strides = [1, 1, 1]} : vector<2x8x32xf32> to vector<2x8x16xf32>
    "tpu.trace_start"() <{level = 10 : i32, message = "bqd,bkd->bqk"}> : () -> ()
    %cst_85 = arith.constant dense<0.000000e+00> : vector<2x8x8xf32>
    %225 = tpu.matmul %223, %224, %cst_85 {dimension_numbers = #tpu.dot_dimension_numbers<[2], [2], [1], [1], [0, 0, 0, 1, 1, 1], [0], [0]>} : vector<2x8x16xf32>, vector<2x8x16xf32>, vector<2x8x8xf32> -> vector<2x8x8xf32>
    "tpu.trace_stop"() : () -> ()
    %cst_86 = arith.constant 2.500000e-01 : f32
    %226 = vector.broadcast %cst_86 : f32 to vector<2x8x8xf32>
    %227 = arith.mulf %225, %226 : vector<2x8x8xf32>
    %228 = vector.shape_cast %2 : vector<8x8xf32> to vector<1x8x8xf32>
    %229 = vector.broadcast %228 : vector<1x8x8xf32> to vector<2x8x8xf32>
    %230 = arith.addf %227, %229 : vector<2x8x8xf32>
    %231 = math.exp %230 : vector<2x8x8xf32>
    %cst_87 = arith.constant dense<0.000000e+00> : vector<2x8xf32>
    %232 = vector.multi_reduction <add>, %231, %cst_87 [2] : vector<2x8x8xf32> to vector<2x8xf32>
    %233 = vector.shape_cast %232 : vector<2x8xf32> to vector<2x8x1xf32>
    %234 = vector.broadcast %233 : vector<2x8x1xf32> to vector<2x8x8xf32>
    %235 = arith.divf %231, %234 : vector<2x8x8xf32>
    %236 = vector.extract_strided_slice %219 {offsets = [0, 0, 0], sizes = [2, 8, 32], strides = [1, 1, 1]} : vector<2x8x64xf32> to vector<2x8x32xf32>
    "tpu.trace_start"() <{level = 10 : i32, message = "bqk,bkd->bqd"}> : () -> ()
    %cst_88 = arith.constant dense<0.000000e+00> : vector<2x8x32xf32>
    %237 = tpu.matmul %235, %236, %cst_88 {dimension_numbers = #tpu.dot_dimension_numbers<[2], [1], [1], [2], [0, 0, 0, 1, 1, 2], [0], [0]>} : vector<2x8x8xf32>, vector<2x8x32xf32>, vector<2x8x32xf32> -> vector<2x8x32xf32>
    "tpu.trace_stop"() : () -> ()
    %238 = vector.shape_cast %237 : vector<2x8x32xf32> to vector<16x32xf32>
    %239 = arith.addf %222, %238 : vector<16x32xf32>
    %240 = vector.extract_strided_slice %215 {offsets = [0, 0, 16], sizes = [2, 8, 16], strides = [1, 1, 1]} : vector<2x8x32xf32> to vector<2x8x16xf32>
    %241 = vector.extract_strided_slice %217 {offsets = [0, 0, 16], sizes = [2, 8, 16], strides = [1, 1, 1]} : vector<2x8x32xf32> to vector<2x8x16xf32>
    "tpu.trace_start"() <{level = 10 : i32, message = "bqd,bkd->bqk"}> : () -> ()
    %cst_89 = arith.constant dense<0.000000e+00> : vector<2x8x8xf32>
    %242 = tpu.matmul %240, %241, %cst_89 {dimension_numbers = #tpu.dot_dimension_numbers<[2], [2], [1], [1], [0, 0, 0, 1, 1, 1], [0], [0]>} : vector<2x8x16xf32>, vector<2x8x16xf32>, vector<2x8x8xf32> -> vector<2x8x8xf32>
    "tpu.trace_stop"() : () -> ()
    %cst_90 = arith.constant 2.500000e-01 : f32
    %243 = vector.broadcast %cst_90 : f32 to vector<2x8x8xf32>
    %244 = arith.mulf %242, %243 : vector<2x8x8xf32>
    %245 = vector.shape_cast %2 : vector<8x8xf32> to vector<1x8x8xf32>
    %246 = vector.broadcast %245 : vector<1x8x8xf32> to vector<2x8x8xf32>
    %247 = arith.addf %244, %246 : vector<2x8x8xf32>
    %248 = math.exp %247 : vector<2x8x8xf32>
    %cst_91 = arith.constant dense<0.000000e+00> : vector<2x8xf32>
    %249 = vector.multi_reduction <add>, %248, %cst_91 [2] : vector<2x8x8xf32> to vector<2x8xf32>
    %250 = vector.shape_cast %249 : vector<2x8xf32> to vector<2x8x1xf32>
    %251 = vector.broadcast %250 : vector<2x8x1xf32> to vector<2x8x8xf32>
    %252 = arith.divf %248, %251 : vector<2x8x8xf32>
    %253 = vector.extract_strided_slice %219 {offsets = [0, 0, 32], sizes = [2, 8, 32], strides = [1, 1, 1]} : vector<2x8x64xf32> to vector<2x8x32xf32>
    "tpu.trace_start"() <{level = 10 : i32, message = "bqk,bkd->bqd"}> : () -> ()
    %cst_92 = arith.constant dense<0.000000e+00> : vector<2x8x32xf32>
    %254 = tpu.matmul %252, %253, %cst_92 {dimension_numbers = #tpu.dot_dimension_numbers<[2], [1], [1], [2], [0, 0, 0, 1, 1, 2], [0], [0]>} : vector<2x8x8xf32>, vector<2x8x32xf32>, vector<2x8x32xf32> -> vector<2x8x32xf32>
    "tpu.trace_stop"() : () -> ()
    %255 = vector.shape_cast %254 : vector<2x8x32xf32> to vector<16x32xf32>
    %256 = arith.addf %239, %255 : vector<16x32xf32>
    %257 = vector.extract_strided_slice %152 {offsets = [0, 0], sizes = [1, 32], strides = [1, 1]} : vector<1x128xf32> to vector<1x32xf32>
    %258 = vector.extract_strided_slice %152 {offsets = [0, 32], sizes = [1, 32], strides = [1, 1]} : vector<1x128xf32> to vector<1x32xf32>
    %cst_93 = arith.constant dense<0.000000e+00> : vector<16xf32>
    %259 = vector.multi_reduction <add>, %256, %cst_93 [1] : vector<16x32xf32> to vector<16xf32>
    %260 = vector.shape_cast %259 : vector<16xf32> to vector<16x1xf32>
    %cst_94 = arith.constant 3.200000e+01 : f32
    %261 = vector.broadcast %cst_94 : f32 to vector<16x1xf32>
    %262 = arith.divf %260, %261 : vector<16x1xf32>
    %263 = vector.broadcast %262 : vector<16x1xf32> to vector<16x32xf32>
    %264 = arith.subf %256, %263 : vector<16x32xf32>
    %265 = arith.mulf %264, %264 : vector<16x32xf32>
    %cst_95 = arith.constant dense<0.000000e+00> : vector<16xf32>
    %266 = vector.multi_reduction <add>, %265, %cst_95 [1] : vector<16x32xf32> to vector<16xf32>
    %267 = vector.shape_cast %266 : vector<16xf32> to vector<16x1xf32>
    %cst_96 = arith.constant 3.200000e+01 : f32
    %268 = vector.broadcast %cst_96 : f32 to vector<16x1xf32>
    %269 = arith.divf %267, %268 : vector<16x1xf32>
    %cst_97 = arith.constant 9.99999996E-13 : f32
    %270 = vector.broadcast %cst_97 : f32 to vector<16x1xf32>
    %271 = arith.addf %269, %270 : vector<16x1xf32>
    %272 = math.rsqrt %271 : vector<16x1xf32>
    %273 = vector.broadcast %272 : vector<16x1xf32> to vector<16x32xf32>
    %274 = arith.mulf %264, %273 : vector<16x32xf32>
    %275 = vector.broadcast %257 : vector<1x32xf32> to vector<16x32xf32>
    %276 = arith.mulf %274, %275 : vector<16x32xf32>
    %277 = vector.broadcast %258 : vector<1x32xf32> to vector<16x32xf32>
    %278 = arith.addf %276, %277 : vector<16x32xf32>
    %cst_98 = arith.constant dense<0.000000e+00> : vector<16x64xf32>
    %279 = tpu.matmul %278, %162, %cst_98 {dimension_numbers = #tpu.dot_dimension_numbers<[1], [0], [0], [1], [0, 0, 1, 1], [], []>} : vector<16x32xf32>, vector<32x64xf32>, vector<16x64xf32> -> vector<16x64xf32>
    %280 = vector.broadcast %156 : vector<1x64xf32> to vector<16x64xf32>
    %281 = arith.addf %279, %280 : vector<16x64xf32>
    %cst_99 = arith.constant 5.000000e-01 : f32
    %282 = vector.broadcast %cst_99 : f32 to vector<16x64xf32>
    %283 = arith.mulf %281, %282 : vector<16x64xf32>
    %cst_100 = arith.constant 0.707106769 : f32
    %284 = vector.broadcast %cst_100 : f32 to vector<16x64xf32>
    %285 = arith.mulf %281, %284 : vector<16x64xf32>
    %286 = math.erf %285 : vector<16x64xf32>
    %cst_101 = arith.constant 1.000000e+00 : f32
    %287 = vector.broadcast %cst_101 : f32 to vector<16x64xf32>
    %288 = arith.addf %287, %286 : vector<16x64xf32>
    %289 = arith.mulf %283, %288 : vector<16x64xf32>
    %cst_102 = arith.constant dense<0.000000e+00> : vector<16x32xf32>
    %290 = tpu.matmul %289, %164, %cst_102 {dimension_numbers = #tpu.dot_dimension_numbers<[1], [0], [0], [1], [0, 0, 1, 1], [], []>} : vector<16x64xf32>, vector<64x32xf32>, vector<16x32xf32> -> vector<16x32xf32>
    %291 = vector.extract_strided_slice %152 {offsets = [0, 96], sizes = [1, 32], strides = [1, 1]} : vector<1x128xf32> to vector<1x32xf32>
    %292 = vector.broadcast %291 : vector<1x32xf32> to vector<16x32xf32>
    %293 = arith.addf %290, %292 : vector<16x32xf32>
    %294 = arith.addf %293, %278 : vector<16x32xf32>
    %c0_103 = arith.constant 0 : index
    %c0_104 = arith.constant 0 : index
    %295 = vector.load %arg3[%c0_103, %c0_104] : memref<16x32xf32, #tpu.memory_space<vmem>>, vector<16x32xf32>
    tpu.vector_store %arg3[%c0_103, %c0_104], %294 {strides = array<i32>} : memref<16x32xf32, #tpu.memory_space<vmem>>, vector<16x32xf32>,
    return
  }
  func.func @transform_0(%arg0: i32) -> (i32, i32) {
    %c0_i32 = arith.constant 0 : i32
    %c0_i32_0 = arith.constant 0 : i32
    %c0_i32_1 = arith.constant 0 : i32
    return %c0_i32, %c0_i32_0 : i32, i32
  }
  func.func @transform_1(%arg0: i32) -> (i32, i32, i32) {
    %c0_i32 = arith.constant 0 : i32
    %c0_i32_0 = arith.constant 0 : i32
    %c0_i32_1 = arith.constant 0 : i32
    %c0_i32_2 = arith.constant 0 : i32
    return %c0_i32, %c0_i32_0, %c0_i32_1 : i32, i32, i32
  }
  func.func @transform_2(%arg0: i32) -> (i32, i32) {
    %c0_i32 = arith.constant 0 : i32
    %c0_i32_0 = arith.constant 0 : i32
    %c0_i32_1 = arith.constant 0 : i32
    return %c0_i32, %c0_i32_0 : i32, i32
  }
}

</mosaic_0001>

<llo_original>
// kernel: tpu_custom_call.1
$region0: #{tpu_custom_call.1}
  #allocation0 [shape = 'u32[]', space=smem, size = 0x4, offset = 0x4, fixed_abs, tag = 'smem constant byte address 0x4 - core index']
  #allocation1 [shape = 'u32[144,128]{1,0:T(1,128)}', space=vmem, size = 0x12000, scoped, tag = 'internal scratch']
  %s0 = inlined_call_operand.hbm [shape: f32[24,128], index: 0, kind: input, shape index: {}]
  %s1 = inlined_call_operand.hbm [shape: f32[2,168,128], index: 1, kind: input, shape index: {}]
  %s2 = inlined_call_operand.hbm [shape: f32[16,32], index: 2, kind: output, shape index: {}]
  %s3 = sld [smem:[#allocation0]]
  $region26: #{tpu_custom_call.1} parent=0
    _
  %s5 = ssub.s32 1, %s3
  %s6 = scalar_select 0, %s5, %s3
  $region1: #{tpu_custom_call.1} parent=0
    #allocation2 [shape = 'u8[12288]{0}', space=vmem, size = 0x3000, scoped, tag = 'input window, operand 0, single buffered']
    #allocation3 [shape = 's32[1]{0}', space=sflag, size = 0x4, scoped, tag = 'scoped memory for tpu_custom_call.1']
    #allocation4 [shape = 's32[1]{0}', space=sflag, size = 0x4, scoped, tag = 'scoped memory for tpu_custom_call.1']
    #allocation5 [shape = 'u8[172032]{0}', space=vmem, size = 0x2a000, scoped, tag = 'input window, operand 1, single buffered']
    #allocation6 [shape = 's32[1]{0}', space=sflag, size = 0x4, scoped, tag = 'scoped memory for tpu_custom_call.1']
    #allocation7 [shape = 'u8[8192]{0}', space=vmem, size = 0x2000, scoped, tag = 'output window, operand 0, single buffered']
    %7 = vsyncpa [#allocation3], 0
    %8 = vsyncpa [#allocation6], 0
    %9 = vsyncpa [#allocation4], 0
    // Predicated region
    $region2: #{tpu_custom_call.1} parent=1 // pred_check
      _
    $region3: #{tpu_custom_call.1} parent=1 // pred_check_branch
      %11 = sbr.rel (0) target = $region5
    $region4: #{tpu_custom_call.1} parent=1 // pred_region
      %s13 = ssub.s32 384, 384
      %14 = vsyncadd [#allocation3], %s13
      %s15 = sshll.u32 [#allocation2], 4
      %s16 = int_to_ptr.vmem [resolvable:$true] %s15
      %21 = dma.hbm_to_vmem [thread:$0]  %s0, 384, %s16, [#allocation3], 128, 128, 8
    $region5: #{tpu_custom_call.1} parent=1 // pred_fallthru
      _
    // Predicated region
    $region6: #{tpu_custom_call.1} parent=1 // pred_check
      _
    $region7: #{tpu_custom_call.1} parent=1 // pred_check_branch
      %23 = sbr.rel (0) target = $region9
    $region8: #{tpu_custom_call.1} parent=1 // pred_region
      %s25 = ssub.s32 5376, 5376
      %26 = vsyncadd [#allocation6], %s25
      %s27 = sshll.u32 [#allocation5], 4
      %s28 = int_to_ptr.vmem [resolvable:$true] %s27
      %33 = dma.hbm_to_vmem [thread:$0]  %s1, 5376, %s28, [#allocation6], 128, 128, 8
    $region9: #{tpu_custom_call.1} parent=1 // pred_fallthru
      _
    // Predicated region
    $region10: #{tpu_custom_call.1} parent=1 // pred_check
      _
    $region11: #{tpu_custom_call.1} parent=1 // pred_check_branch
      %35 = sbr.rel (0) target = $region13
    $region12: #{tpu_custom_call.1} parent=1 // pred_region
      %36 = dma.done [#allocation3], 384
    $region13: #{tpu_custom_call.1} parent=1 // pred_fallthru
      _
    // Predicated region
    $region14: #{tpu_custom_call.1} parent=1 // pred_check
      _
    $region15: #{tpu_custom_call.1} parent=1 // pred_check_branch
      %38 = sbr.rel (0) target = $region17
    $region16: #{tpu_custom_call.1} parent=1 // pred_region
      %39 = dma.done [#allocation6], 5376
    $region17: #{tpu_custom_call.1} parent=1 // pred_fallthru
      _
    %v40 = vld [vmem:[#allocation2] sm:$0xff]
    %v41 = vld [vmem:[#allocation2 + $0x8] sm:$0xff]
    %v42 = vld [vmem:[#allocation2 + $0x10] sm:$0xff]
    %v43 = vld [vmem:[#allocation5] sm:$0x1]
    %v44 = vld [vmem:[#allocation5 + $0x1] sm:$0x1]
    %v45 = vld [vmem:[#allocation5 + $0x2] sm:$0x1]
    %v46 = vld [vmem:[#allocation5 + $0x3] sm:$0x1]
    %v47 = vld [vmem:[#allocation5 + $0x4] sm:$0xff]
    %v48 = vld [vmem:[#allocation5 + $0xc] sm:$0xff]
    %v49 = vld [vmem:[#allocation5 + $0x14] sm:$0xff]
    %v50 = vld [vmem:[#allocation5 + $0x1c] sm:$0xff]
    %v51 = vld [vmem:[#allocation5 + $0x24] sm:$0xff]
    %v52 = vld [vmem:[#allocation5 + $0x2c] sm:$0xff]
    %v53 = vld [vmem:[#allocation5 + $0x34] sm:$0xff]
    %v54 = vld [vmem:[#allocation5 + $0x3c] sm:$0xff]
    %v55 = vld [vmem:[#allocation5 + $0x44] sm:$0xff]
    %v56 = vld [vmem:[#allocation5 + $0x4c] sm:$0xff]
    %v57 = vld [vmem:[#allocation5 + $0x54] sm:$0xff]
    %v58 = vld [vmem:[#allocation5 + $0x5c] sm:$0xff]
    %v59 = vld [vmem:[#allocation5 + $0x64] sm:$0xff]
    %v60 = vld [vmem:[#allocation5 + $0x6c] sm:$0xff]
    %v61 = vld [vmem:[#allocation5 + $0x74] sm:$0xff]
    %v62 = vld [vmem:[#allocation5 + $0x7c] sm:$0xff]
    %v63 = vld [vmem:[#allocation5 + $0x84] sm:$0xff]
    %v64 = vld [vmem:[#allocation5 + $0x8c] sm:$0xff]
    %v65 = vld [vmem:[#allocation5 + $0x94] sm:$0xff]
    %v66 = vld [vmem:[#allocation5 + $0x9c] sm:$0xff]
    %vm67 = vcmask 261120
    %v68 = vsel %vm67, %v40, 0.0
    %69 = vadd.xlane.f32.xlu0 %v68
    %v70 = vpop.xlane.xlu0 %69
    %v71 = vsel %vm67, %v41, 0.0
    %72 = vadd.xlane.f32.xlu0 %v71
    %v73 = vpop.xlane.xlu0 %72
    %v74 = vrcp.pop 32.0
    %v75 = vmul.f32 %v70, %v74
    %v76 = vmul.f32 %v73, %v74
    %v77 = vsub.f32 %v40, %v75
    %v78 = vsub.f32 %v41, %v76
    %v79 = vmul.f32 %v77, %v77
    %v80 = vmul.f32 %v78, %v78
    %v81 = vsel %vm67, %v79, 0.0
    %82 = vadd.xlane.f32.xlu0 %v81
    %v83 = vpop.xlane.xlu0 %82
    %v84 = vsel %vm67, %v80, 0.0
    %85 = vadd.xlane.f32.xlu0 %v84
    %v86 = vpop.xlane.xlu0 %85
    %v87 = vmul.f32 %v83, %v74
    %v88 = vmul.f32 %v86, %v74
    %v89 = vadd.f32 %v87, 1e-12
    %v90 = vadd.f32 %v88, 1e-12
    %v91 = vrsqrt.pop %v89
    %v92 = vrsqrt.pop %v90
    %v93 = vmul.f32 %v77, %v91
    %v94 = vmul.f32 %v78, %v92
    %v95 = vlaneseq
    %v96 = vshrl.u32 %v95, 7
    %v97 = vsub.s32 0, %v96
    %v98 = vrot.slane %v43, %v97
    %v99 = vmul.f32 %v93, %v98
    %v100 = vmul.f32 %v94, %v98
    %102 = vrot.lane.b32.xlu0 %v98, 96
    %v103 = vpop.permute.xlu0 %102
    %v105 = vadd.f32 %v99, %v103
    %v106 = vadd.f32 %v100, %v103
    %109 = vrot.lane.b32.xlu0 %v40, 96
    %v110 = vpop.permute.xlu0 %109
    %111 = vrot.lane.b32.xlu0 %v41, 96
    %v112 = vpop.permute.xlu0 %111
    %v115 = vsel %vm67, %v110, 0.0
    %116 = vadd.xlane.f32.xlu0 %v115
    %v117 = vpop.xlane.xlu0 %116
    %v118 = vsel %vm67, %v112, 0.0
    %119 = vadd.xlane.f32.xlu0 %v118
    %v120 = vpop.xlane.xlu0 %119
    %v121 = vmul.f32 %v117, %v74
    %v122 = vmul.f32 %v120, %v74
    %v123 = vsub.f32 %v40, %v121
    %v124 = vsub.f32 %v41, %v122
    %v125 = vmul.f32 %v123, %v123
    %v126 = vmul.f32 %v124, %v124
    %129 = vrot.lane.b32.xlu0 %v125, 96
    %v130 = vpop.permute.xlu0 %129
    %131 = vrot.lane.b32.xlu0 %v126, 96
    %v132 = vpop.permute.xlu0 %131
    %v135 = vsel %vm67, %v130, 0.0
    %136 = vadd.xlane.f32.xlu0 %v135
    %v137 = vpop.xlane.xlu0 %136
    %v138 = vsel %vm67, %v132, 0.0
    %139 = vadd.xlane.f32.xlu0 %v138
    %v140 = vpop.xlane.xlu0 %139
    %v141 = vmul.f32 %v137, %v74
    %v142 = vmul.f32 %v140, %v74
    %v143 = vadd.f32 %v141, 1e-12
    %v144 = vadd.f32 %v142, 1e-12
    %v145 = vrsqrt.pop %v143
    %v146 = vrsqrt.pop %v144
    %v147 = vmul.f32 %v123, %v145
    %v148 = vmul.f32 %v124, %v146
    %v149 = vmul.f32 %v147, %v103
    %v150 = vmul.f32 %v148, %v103
    %151 = vrot.lane.b32.xlu0 %v98, 64
    %v152 = vpop.permute.xlu0 %151
    %v154 = vadd.f32 %v149, %v152
    %v155 = vadd.f32 %v150, %v152
    %158 = vrot.lane.b32.xlu0 %v154, 96
    %v159 = vpop.permute.xlu0 %158
    %160 = vrot.lane.b32.xlu0 %v155, 96
    %v161 = vpop.permute.xlu0 %160
    %v162 = vsel %vm67, %v159, 0
    %v164 = vsel %vm67, %v161, 0
    %166 = vmatprep.subr.mxu0 0.0
    %167 = vmatpush1.msra.mxu0 0.0
    %168 = vmatprep.subr.mxu0 0.0
    %169 = vmatpush1.msra.mxu0 0.0
    %170 = vmatprep.subr.mxu0 0.0
    %171 = vmatpush1.msra.mxu0 0.0
    %172 = vmatprep.subr.mxu0 0.0
    %173 = vmatpush1.msra.mxu0 0.0
    %174 = vmatprep.subr.mxu0 0.0
    %175 = vmatpush1.msra.mxu0 0.0
    %176 = vmatprep.subr.mxu0 0.0
    %177 = vmatpush1.msra.mxu0 0.0
    %178 = vmatprep.subr.mxu0 0.0
    %179 = vmatpush1.msra.mxu0 0.0
    %180 = vmatprep.subr.mxu0 0.0
    %181 = vmatpush1.msra.mxu0 0.0
    %182 = vmatprep.subr.mxu0 0.0
    %183 = vmatpush1.msra.mxu0 0.0
    %184 = vmatprep.subr.mxu0 0.0
    %185 = vmatpush1.msra.mxu0 0.0
    %186 = vmatprep.subr.mxu0 0.0
    %187 = vmatpush1.msra.mxu0 0.0
    %188 = vmatprep.subr.mxu0 0.0
    %189 = vmatpush1.msra.mxu0 0.0
    %190 = vmatprep.subr.mxu0 0.0
    %191 = vmatpush1.msra.mxu0 %v54
    %192 = vmatprep.subr.mxu0 0.0
    %193 = vmatpush1.msra.mxu0 %v53
    %194 = vmatprep.subr.mxu0 0.0
    %195 = vmatpush1.msra.mxu0 %v52
    %196 = vmatprep.subr.mxu0 0.0
    %197 = vmatpush1.msra.mxu0 %v51
    %198 = vmatprep.subr.mxu0 0.0
    %199 = vmatpush2.msra.mxu0 0.0
    %200 = vmatprep.subr.mxu0 0.0
    %201 = vmatpush2.msra.mxu0 0.0
    %202 = vmatprep.subr.mxu0 0.0
    %203 = vmatpush2.msra.mxu0 0.0
    %204 = vmatprep.subr.mxu0 0.0
    %205 = vmatpush2.msra.mxu0 0.0
    %206 = vmatprep.subr.mxu0 0.0
    %207 = vmatpush2.msra.mxu0 0.0
    %208 = vmatprep.subr.mxu0 0.0
    %209 = vmatpush2.msra.mxu0 0.0
    %210 = vmatprep.subr.mxu0 0.0
    %211 = vmatpush2.msra.mxu0 0.0
    %212 = vmatprep.subr.mxu0 0.0
    %213 = vmatpush2.msra.mxu0 0.0
    %214 = vmatprep.subr.mxu0 0.0
    %215 = vmatpush2.msra.mxu0 0.0
    %216 = vmatprep.subr.mxu0 0.0
    %217 = vmatpush2.msra.mxu0 0.0
    %218 = vmatprep.subr.mxu0 0.0
    %219 = vmatpush2.msra.mxu0 0.0
    %220 = vmatprep.subr.mxu0 0.0
    %221 = vmatpush2.msra.mxu0 0.0
    %222 = vmatprep.subr.mxu0 0.0
    %223 = vmatpush2.msra.mxu0 0.0
    %224 = vmatprep.subr.mxu0 0.0
    %225 = vmatpush2.msra.mxu0 0.0
    %226 = vmatprep.subr.mxu0 0.0
    %227 = vmatpush2.msra.mxu0 0.0
    %228 = vmatprep.subr.mxu0 0.0
    %229 = vmatpush2.msra.mxu0 0.0
    %230 = vmatprep.mubr.f32.mxu0 0.0
    %231 = vmatmul.mubr.f32.gmra.mxu0 %v162
    %v232 = vpop.f32.mrf.mxu0
    %v233 = vadd.f32 0.0, %v232
    %v234 = vpop.f32.mrf.mxu0
    %235 = vmatprep.mubr.f32.mxu0 0.0
    %236 = vmatmul.mubr.f32.gmra.mxu0 %v164
    %v237 = vpop.f32.mrf.mxu0
    %v238 = vadd.f32 0.0, %v237
    %v239 = vpop.f32.mrf.mxu0
    %240 = vdwg.mxu0
    %v242 = vsel %vm67, %v105, 0
    %v245 = vsel %vm67, %v106, 0
    %247 = vmatprep.subr.mxu0 0.0
    %248 = vmatpush1.msra.mxu0 0.0
    %249 = vmatprep.subr.mxu0 0.0
    %250 = vmatpush1.msra.mxu0 0.0
    %251 = vmatprep.subr.mxu0 0.0
    %252 = vmatpush1.msra.mxu0 0.0
    %253 = vmatprep.subr.mxu0 0.0
    %254 = vmatpush1.msra.mxu0 0.0
    %255 = vmatprep.subr.mxu0 0.0
    %256 = vmatpush1.msra.mxu0 0.0
    %257 = vmatprep.subr.mxu0 0.0
    %258 = vmatpush1.msra.mxu0 0.0
    %259 = vmatprep.subr.mxu0 0.0
    %260 = vmatpush1.msra.mxu0 0.0
    %261 = vmatprep.subr.mxu0 0.0
    %262 = vmatpush1.msra.mxu0 0.0
    %263 = vmatprep.subr.mxu0 0.0
    %264 = vmatpush1.msra.mxu0 0.0
    %265 = vmatprep.subr.mxu0 0.0
    %266 = vmatpush1.msra.mxu0 0.0
    %267 = vmatprep.subr.mxu0 0.0
    %268 = vmatpush1.msra.mxu0 0.0
    %269 = vmatprep.subr.mxu0 0.0
    %270 = vmatpush1.msra.mxu0 0.0
    %271 = vmatprep.subr.mxu0 0.0
    %272 = vmatpush1.msra.mxu0 %v50
    %273 = vmatprep.subr.mxu0 0.0
    %274 = vmatpush1.msra.mxu0 %v49
    %275 = vmatprep.subr.mxu0 0.0
    %276 = vmatpush1.msra.mxu0 %v48
    %277 = vmatprep.subr.mxu0 0.0
    %278 = vmatpush1.msra.mxu0 %v47
    %279 = vmatprep.subr.mxu0 0.0
    %280 = vmatpush2.msra.mxu0 0.0
    %281 = vmatprep.subr.mxu0 0.0
    %282 = vmatpush2.msra.mxu0 0.0
    %283 = vmatprep.subr.mxu0 0.0
    %284 = vmatpush2.msra.mxu0 0.0
    %285 = vmatprep.subr.mxu0 0.0
    %286 = vmatpush2.msra.mxu0 0.0
    %287 = vmatprep.subr.mxu0 0.0
    %288 = vmatpush2.msra.mxu0 0.0
    %289 = vmatprep.subr.mxu0 0.0
    %290 = vmatpush2.msra.mxu0 0.0
    %291 = vmatprep.subr.mxu0 0.0
    %292 = vmatpush2.msra.mxu0 0.0
    %293 = vmatprep.subr.mxu0 0.0
    %294 = vmatpush2.msra.mxu0 0.0
    %295 = vmatprep.subr.mxu0 0.0
    %296 = vmatpush2.msra.mxu0 0.0
    %297 = vmatprep.subr.mxu0 0.0
    %298 = vmatpush2.msra.mxu0 0.0
    %299 = vmatprep.subr.mxu0 0.0
    %300 = vmatpush2.msra.mxu0 0.0
    %301 = vmatprep.subr.mxu0 0.0
    %302 = vmatpush2.msra.mxu0 0.0
    %303 = vmatprep.subr.mxu0 0.0
    %304 = vmatpush2.msra.mxu0 0.0
    %305 = vmatprep.subr.mxu0 0.0
    %306 = vmatpush2.msra.mxu0 0.0
    %307 = vmatprep.subr.mxu0 0.0
    %308 = vmatpush2.msra.mxu0 0.0
    %309 = vmatprep.subr.mxu0 0.0
    %310 = vmatpush2.msra.mxu0 0.0
    %311 = vmatprep.mubr.f32.mxu0 0.0
    %312 = vmatmul.mubr.f32.gmra.mxu0 %v242
    %v313 = vpop.f32.mrf.mxu0
    %v314 = vadd.f32 %v233, %v313
    %v315 = vpop.f32.mrf.mxu0
    %316 = vmatprep.mubr.f32.mxu0 0.0
    %317 = vmatmul.mubr.f32.gmra.mxu0 %v245
    %v318 = vpop.f32.mrf.mxu0
    %v319 = vadd.f32 %v238, %v318
    %v320 = vpop.f32.mrf.mxu0
    %321 = vdwg.mxu0
    %v322 = vlaneseq
    %v323 = vshrl.u32 %v322, 7
    %v324 = vsub.s32 0, %v323
    %v325 = vrot.slane %v45, %v324
    %v326 = vadd.f32 %v314, %v325
    %v327 = vadd.f32 %v319, %v325
    %v328 = vlaneseq
    %v329 = vshrl.u32 %v328, 7
    %v330 = vsub.s32 0, %v329
    %v331 = vrot.slane %v44, %v330
    %333 = vrot.lane.b32.xlu0 %v331, 96
    %v334 = vpop.permute.xlu0 %333
    %v336 = vadd.f32 %v154, %v334
    %v337 = vadd.f32 %v155, %v334
    %339 = vrot.lane.b32.xlu0 %v326, 96
    %v340 = vpop.permute.xlu0 %339
    %vm341 = vcmask 130048
    %v342 = vsel %vm341, %v326, 0
    %v344 = vsel %vm341, %v340, 0
    %346 = vmatprep.subr.mxu0 0.0
    %347 = vmatpush1.xpose.msra.mxu0 0.0
    %348 = vmatprep.subr.mxu0 0.0
    %349 = vmatpush1.xpose.msra.mxu0 0.0
    %350 = vmatprep.subr.mxu0 0.0
    %351 = vmatpush1.xpose.msra.mxu0 0.0
    %352 = vmatprep.subr.mxu0 0.0
    %353 = vmatpush1.xpose.msra.mxu0 0.0
    %354 = vmatprep.subr.mxu0 0.0
    %355 = vmatpush1.xpose.msra.mxu0 0.0
    %356 = vmatprep.subr.mxu0 0.0
    %357 = vmatpush1.xpose.msra.mxu0 0.0
    %358 = vmatprep.subr.mxu0 0.0
    %359 = vmatpush1.xpose.msra.mxu0 0.0
    %360 = vmatprep.subr.mxu0 0.0
    %361 = vmatpush1.xpose.msra.mxu0 0.0
    %362 = vmatprep.subr.mxu0 0.0
    %363 = vmatpush1.xpose.msra.mxu0 0.0
    %364 = vmatprep.subr.mxu0 0.0
    %365 = vmatpush1.xpose.msra.mxu0 0.0
    %366 = vmatprep.subr.mxu0 0.0
    %367 = vmatpush1.xpose.msra.mxu0 0.0
    %368 = vmatprep.subr.mxu0 0.0
    %369 = vmatpush1.xpose.msra.mxu0 0.0
    %370 = vmatprep.subr.mxu0 0.0
    %371 = vmatpush1.xpose.msra.mxu0 0.0
    %372 = vmatprep.subr.mxu0 0.0
    %373 = vmatpush1.xpose.msra.mxu0 0.0
    %374 = vmatprep.subr.mxu0 0.0
    %375 = vmatpush1.xpose.msra.mxu0 0.0
    %376 = vmatprep.subr.mxu0 0.0
    %377 = vmatpush1.xpose.msra.mxu0 %v344
    %378 = vmatprep.subr.mxu0 0.0
    %379 = vmatpush2.xpose.msra.mxu0 0.0
    %380 = vmatprep.subr.mxu0 0.0
    %381 = vmatpush2.xpose.msra.mxu0 0.0
    %382 = vmatprep.subr.mxu0 0.0
    %383 = vmatpush2.xpose.msra.mxu0 0.0
    %384 = vmatprep.subr.mxu0 0.0
    %385 = vmatpush2.xpose.msra.mxu0 0.0
    %386 = vmatprep.subr.mxu0 0.0
    %387 = vmatpush2.xpose.msra.mxu0 0.0
    %388 = vmatprep.subr.mxu0 0.0
    %389 = vmatpush2.xpose.msra.mxu0 0.0
    %390 = vmatprep.subr.mxu0 0.0
    %391 = vmatpush2.xpose.msra.mxu0 0.0
    %392 = vmatprep.subr.mxu0 0.0
    %393 = vmatpush2.xpose.msra.mxu0 0.0
    %394 = vmatprep.subr.mxu0 0.0
    %395 = vmatpush2.xpose.msra.mxu0 0.0
    %396 = vmatprep.subr.mxu0 0.0
    %397 = vmatpush2.xpose.msra.mxu0 0.0
    %398 = vmatprep.subr.mxu0 0.0
    %399 = vmatpush2.xpose.msra.mxu0 0.0
    %400 = vmatprep.subr.mxu0 0.0
    %401 = vmatpush2.xpose.msra.mxu0 0.0
    %402 = vmatprep.subr.mxu0 0.0
    %403 = vmatpush2.xpose.msra.mxu0 0.0
    %404 = vmatprep.subr.mxu0 0.0
    %405 = vmatpush2.xpose.msra.mxu0 0.0
    %406 = vmatprep.subr.mxu0 0.0
    %407 = vmatpush2.xpose.msra.mxu0 0.0
    %408 = vmatprep.subr.mxu0 0.0
    %409 = vmatpush2.xpose.msra.mxu0 0.0
    %410 = vmatprep.mubr.f32.mxu0 0.0
    %411 = vmatmul.mubr.f32.gmra.mxu0 %v342
    %v412 = vpop.f32.mrf.mxu0
    %v413 = vadd.f32 0.0, %v412
    %v414 = vpop.f32.mrf.mxu0
    %415 = vdwg.mxu0
    %417 = vrot.lane.b32.xlu0 %v327, 96
    %v418 = vpop.permute.xlu0 %417
    %v419 = vsel %vm341, %v327, 0
    %v421 = vsel %vm341, %v418, 0
    %423 = vmatprep.subr.mxu0 0.0
    %424 = vmatpush1.xpose.msra.mxu0 0.0
    %425 = vmatprep.subr.mxu0 0.0
    %426 = vmatpush1.xpose.msra.mxu0 0.0
    %427 = vmatprep.subr.mxu0 0.0
    %428 = vmatpush1.xpose.msra.mxu0 0.0
    %429 = vmatprep.subr.mxu0 0.0
    %430 = vmatpush1.xpose.msra.mxu0 0.0
    %431 = vmatprep.subr.mxu0 0.0
    %432 = vmatpush1.xpose.msra.mxu0 0.0
    %433 = vmatprep.subr.mxu0 0.0
    %434 = vmatpush1.xpose.msra.mxu0 0.0
    %435 = vmatprep.subr.mxu0 0.0
    %436 = vmatpush1.xpose.msra.mxu0 0.0
    %437 = vmatprep.subr.mxu0 0.0
    %438 = vmatpush1.xpose.msra.mxu0 0.0
    %439 = vmatprep.subr.mxu0 0.0
    %440 = vmatpush1.xpose.msra.mxu0 0.0
    %441 = vmatprep.subr.mxu0 0.0
    %442 = vmatpush1.xpose.msra.mxu0 0.0
    %443 = vmatprep.subr.mxu0 0.0
    %444 = vmatpush1.xpose.msra.mxu0 0.0
    %445 = vmatprep.subr.mxu0 0.0
    %446 = vmatpush1.xpose.msra.mxu0 0.0
    %447 = vmatprep.subr.mxu0 0.0
    %448 = vmatpush1.xpose.msra.mxu0 0.0
    %449 = vmatprep.subr.mxu0 0.0
    %450 = vmatpush1.xpose.msra.mxu0 0.0
    %451 = vmatprep.subr.mxu0 0.0
    %452 = vmatpush1.xpose.msra.mxu0 0.0
    %453 = vmatprep.subr.mxu0 0.0
    %454 = vmatpush1.xpose.msra.mxu0 %v421
    %455 = vmatprep.subr.mxu0 0.0
    %456 = vmatpush2.xpose.msra.mxu0 0.0
    %457 = vmatprep.subr.mxu0 0.0
    %458 = vmatpush2.xpose.msra.mxu0 0.0
    %459 = vmatprep.subr.mxu0 0.0
    %460 = vmatpush2.xpose.msra.mxu0 0.0
    %461 = vmatprep.subr.mxu0 0.0
    %462 = vmatpush2.xpose.msra.mxu0 0.0
    %463 = vmatprep.subr.mxu0 0.0
    %464 = vmatpush2.xpose.msra.mxu0 0.0
    %465 = vmatprep.subr.mxu0 0.0
    %466 = vmatpush2.xpose.msra.mxu0 0.0
    %467 = vmatprep.subr.mxu0 0.0
    %468 = vmatpush2.xpose.msra.mxu0 0.0
    %469 = vmatprep.subr.mxu0 0.0
    %470 = vmatpush2.xpose.msra.mxu0 0.0
    %471 = vmatprep.subr.mxu0 0.0
    %472 = vmatpush2.xpose.msra.mxu0 0.0
    %473 = vmatprep.subr.mxu0 0.0
    %474 = vmatpush2.xpose.msra.mxu0 0.0
    %475 = vmatprep.subr.mxu0 0.0
    %476 = vmatpush2.xpose.msra.mxu0 0.0
    %477 = vmatprep.subr.mxu0 0.0
    %478 = vmatpush2.xpose.msra.mxu0 0.0
    %479 = vmatprep.subr.mxu0 0.0
    %480 = vmatpush2.xpose.msra.mxu0 0.0
    %481 = vmatprep.subr.mxu0 0.0
    %482 = vmatpush2.xpose.msra.mxu0 0.0
    %483 = vmatprep.subr.mxu0 0.0
    %484 = vmatpush2.xpose.msra.mxu0 0.0
    %485 = vmatprep.subr.mxu0 0.0
    %486 = vmatpush2.xpose.msra.mxu0 0.0
    %487 = vmatprep.mubr.f32.mxu0 0.0
    %488 = vmatmul.mubr.f32.gmra.mxu0 %v419
    %v489 = vpop.f32.mrf.mxu0
    %v490 = vadd.f32 0.0, %v489
    %v491 = vpop.f32.mrf.mxu0
    %492 = vdwg.mxu0
    %v493 = vmul.f32 %v413, 0.25
    %v494 = vmul.f32 %v490, 0.25
    %v495 = vadd.f32 %v493, %v42
    %v496 = vadd.f32 %v494, %v42
    %v497 = vmul.f32 %v495, 1.442695
    %v498 = vpow.pop %v497
    %v499 = vmul.f32 %v496, 1.442695
    %v500 = vpow.pop %v499
    %vm501 = vcmask 64512
    %v502 = vsel %vm501, %v498, 0.0
    %503 = vadd.xlane.f32.xlu0 %v502
    %v504 = vpop.xlane.xlu0 %503
    %v505 = vsel %vm501, %v500, 0.0
    %506 = vadd.xlane.f32.xlu0 %v505
    %v507 = vpop.xlane.xlu0 %506
    %v508 = vrcp.pop %v504
    %v509 = vmul.f32 %v498, %v508
    %v510 = vrcp.pop %v507
    %v511 = vmul.f32 %v500, %v510
    %512 = vrot.lane.b32.xlu0 %v326, 64
    %v513 = vpop.permute.xlu0 %512
    %v516 = vsel %vm501, %v509, 0
    %518 = vmatprep.subr.mxu0 0.0
    %519 = vmatpush1.msra.mxu0 0.0
    %520 = vmatprep.subr.mxu0 0.0
    %521 = vmatpush1.msra.mxu0 0.0
    %522 = vmatprep.subr.mxu0 0.0
    %523 = vmatpush1.msra.mxu0 0.0
    %524 = vmatprep.subr.mxu0 0.0
    %525 = vmatpush1.msra.mxu0 0.0
    %526 = vmatprep.subr.mxu0 0.0
    %527 = vmatpush1.msra.mxu0 0.0
    %528 = vmatprep.subr.mxu0 0.0
    %529 = vmatpush1.msra.mxu0 0.0
    %530 = vmatprep.subr.mxu0 0.0
    %531 = vmatpush1.msra.mxu0 0.0
    %532 = vmatprep.subr.mxu0 0.0
    %533 = vmatpush1.msra.mxu0 0.0
    %534 = vmatprep.subr.mxu0 0.0
    %535 = vmatpush1.msra.mxu0 0.0
    %536 = vmatprep.subr.mxu0 0.0
    %537 = vmatpush1.msra.mxu0 0.0
    %538 = vmatprep.subr.mxu0 0.0
    %539 = vmatpush1.msra.mxu0 0.0
    %540 = vmatprep.subr.mxu0 0.0
    %541 = vmatpush1.msra.mxu0 0.0
    %542 = vmatprep.subr.mxu0 0.0
    %543 = vmatpush1.msra.mxu0 0.0
    %544 = vmatprep.subr.mxu0 0.0
    %545 = vmatpush1.msra.mxu0 0.0
    %546 = vmatprep.subr.mxu0 0.0
    %547 = vmatpush1.msra.mxu0 0.0
    %548 = vmatprep.subr.mxu0 0.0
    %549 = vmatpush1.msra.mxu0 %v513
    %550 = vmatprep.subr.mxu0 0.0
    %551 = vmatpush2.msra.mxu0 0.0
    %552 = vmatprep.subr.mxu0 0.0
    %553 = vmatpush2.msra.mxu0 0.0
    %554 = vmatprep.subr.mxu0 0.0
    %555 = vmatpush2.msra.mxu0 0.0
    %556 = vmatprep.subr.mxu0 0.0
    %557 = vmatpush2.msra.mxu0 0.0
    %558 = vmatprep.subr.mxu0 0.0
    %559 = vmatpush2.msra.mxu0 0.0
    %560 = vmatprep.subr.mxu0 0.0
    %561 = vmatpush2.msra.mxu0 0.0
    %562 = vmatprep.subr.mxu0 0.0
    %563 = vmatpush2.msra.mxu0 0.0
    %564 = vmatprep.subr.mxu0 0.0
    %565 = vmatpush2.msra.mxu0 0.0
    %566 = vmatprep.subr.mxu0 0.0
    %567 = vmatpush2.msra.mxu0 0.0
    %568 = vmatprep.subr.mxu0 0.0
    %569 = vmatpush2.msra.mxu0 0.0
    %570 = vmatprep.subr.mxu0 0.0
    %571 = vmatpush2.msra.mxu0 0.0
    %572 = vmatprep.subr.mxu0 0.0
    %573 = vmatpush2.msra.mxu0 0.0
    %574 = vmatprep.subr.mxu0 0.0
    %575 = vmatpush2.msra.mxu0 0.0
    %576 = vmatprep.subr.mxu0 0.0
    %577 = vmatpush2.msra.mxu0 0.0
    %578 = vmatprep.subr.mxu0 0.0
    %579 = vmatpush2.msra.mxu0 0.0
    %580 = vmatprep.subr.mxu0 0.0
    %581 = vmatpush2.msra.mxu0 0.0
    %582 = vmatprep.mubr.f32.mxu0 0.0
    %583 = vmatmul.mubr.f32.gmra.mxu0 %v516
    %v584 = vpop.f32.mrf.mxu0
    %v585 = vadd.f32 0.0, %v584
    %v586 = vpop.f32.mrf.mxu0
    %587 = vdwg.mxu0
    %588 = vrot.lane.b32.xlu0 %v327, 64
    %v589 = vpop.permute.xlu0 %588
    %v592 = vsel %vm501, %v511, 0
    %594 = vmatprep.subr.mxu0 0.0
    %595 = vmatpush1.msra.mxu0 0.0
    %596 = vmatprep.subr.mxu0 0.0
    %597 = vmatpush1.msra.mxu0 0.0
    %598 = vmatprep.subr.mxu0 0.0
    %599 = vmatpush1.msra.mxu0 0.0
    %600 = vmatprep.subr.mxu0 0.0
    %601 = vmatpush1.msra.mxu0 0.0
    %602 = vmatprep.subr.mxu0 0.0
    %603 = vmatpush1.msra.mxu0 0.0
    %604 = vmatprep.subr.mxu0 0.0
    %605 = vmatpush1.msra.mxu0 0.0
    %606 = vmatprep.subr.mxu0 0.0
    %607 = vmatpush1.msra.mxu0 0.0
    %608 = vmatprep.subr.mxu0 0.0
    %609 = vmatpush1.msra.mxu0 0.0
    %610 = vmatprep.subr.mxu0 0.0
    %611 = vmatpush1.msra.mxu0 0.0
    %612 = vmatprep.subr.mxu0 0.0
    %613 = vmatpush1.msra.mxu0 0.0
    %614 = vmatprep.subr.mxu0 0.0
    %615 = vmatpush1.msra.mxu0 0.0
    %616 = vmatprep.subr.mxu0 0.0
    %617 = vmatpush1.msra.mxu0 0.0
    %618 = vmatprep.subr.mxu0 0.0
    %619 = vmatpush1.msra.mxu0 0.0
    %620 = vmatprep.subr.mxu0 0.0
    %621 = vmatpush1.msra.mxu0 0.0
    %622 = vmatprep.subr.mxu0 0.0
    %623 = vmatpush1.msra.mxu0 0.0
    %624 = vmatprep.subr.mxu0 0.0
    %625 = vmatpush1.msra.mxu0 %v589
    %626 = vmatprep.subr.mxu0 0.0
    %627 = vmatpush2.msra.mxu0 0.0
    %628 = vmatprep.subr.mxu0 0.0
    %629 = vmatpush2.msra.mxu0 0.0
    %630 = vmatprep.subr.mxu0 0.0
    %631 = vmatpush2.msra.mxu0 0.0
    %632 = vmatprep.subr.mxu0 0.0
    %633 = vmatpush2.msra.mxu0 0.0
    %634 = vmatprep.subr.mxu0 0.0
    %635 = vmatpush2.msra.mxu0 0.0
    %636 = vmatprep.subr.mxu0 0.0
    %637 = vmatpush2.msra.mxu0 0.0
    %638 = vmatprep.subr.mxu0 0.0
    %639 = vmatpush2.msra.mxu0 0.0
    %640 = vmatprep.subr.mxu0 0.0
    %641 = vmatpush2.msra.mxu0 0.0
    %642 = vmatprep.subr.mxu0 0.0
    %643 = vmatpush2.msra.mxu0 0.0
    %644 = vmatprep.subr.mxu0 0.0
    %645 = vmatpush2.msra.mxu0 0.0
    %646 = vmatprep.subr.mxu0 0.0
    %647 = vmatpush2.msra.mxu0 0.0
    %648 = vmatprep.subr.mxu0 0.0
    %649 = vmatpush2.msra.mxu0 0.0
    %650 = vmatprep.subr.mxu0 0.0
    %651 = vmatpush2.msra.mxu0 0.0
    %652 = vmatprep.subr.mxu0 0.0
    %653 = vmatpush2.msra.mxu0 0.0
    %654 = vmatprep.subr.mxu0 0.0
    %655 = vmatpush2.msra.mxu0 0.0
    %656 = vmatprep.subr.mxu0 0.0
    %657 = vmatpush2.msra.mxu0 0.0
    %658 = vmatprep.mubr.f32.mxu0 0.0
    %659 = vmatmul.mubr.f32.gmra.mxu0 %v592
    %v660 = vpop.f32.mrf.mxu0
    %v661 = vadd.f32 0.0, %v660
    %v662 = vpop.f32.mrf.mxu0
    %663 = vdwg.mxu0
    %666 = vrot.lane.b32.xlu0 %v585, 32
    %v667 = vpop.permute.xlu0 %666
    %668 = vrot.lane.b32.xlu0 %v661, 32
    %v669 = vpop.permute.xlu0 %668
    %v672 = vadd.f32 %v336, %v667
    %v673 = vadd.f32 %v337, %v669
    %674 = vrot.lane.b32.xlu0 %v326, 112
    %v675 = vpop.permute.xlu0 %674
    %676 = vrot.lane.b32.xlu0 %v326, 80
    %v677 = vpop.permute.xlu0 %676
    %v678 = vsel %vm341, %v675, 0
    %v680 = vsel %vm341, %v677, 0
    %682 = vmatprep.subr.mxu0 0.0
    %683 = vmatpush1.xpose.msra.mxu0 0.0
    %684 = vmatprep.subr.mxu0 0.0
    %685 = vmatpush1.xpose.msra.mxu0 0.0
    %686 = vmatprep.subr.mxu0 0.0
    %687 = vmatpush1.xpose.msra.mxu0 0.0
    %688 = vmatprep.subr.mxu0 0.0
    %689 = vmatpush1.xpose.msra.mxu0 0.0
    %690 = vmatprep.subr.mxu0 0.0
    %691 = vmatpush1.xpose.msra.mxu0 0.0
    %692 = vmatprep.subr.mxu0 0.0
    %693 = vmatpush1.xpose.msra.mxu0 0.0
    %694 = vmatprep.subr.mxu0 0.0
    %695 = vmatpush1.xpose.msra.mxu0 0.0
    %696 = vmatprep.subr.mxu0 0.0
    %697 = vmatpush1.xpose.msra.mxu0 0.0
    %698 = vmatprep.subr.mxu0 0.0
    %699 = vmatpush1.xpose.msra.mxu0 0.0
    %700 = vmatprep.subr.mxu0 0.0
    %701 = vmatpush1.xpose.msra.mxu0 0.0
    %702 = vmatprep.subr.mxu0 0.0
    %703 = vmatpush1.xpose.msra.mxu0 0.0
    %704 = vmatprep.subr.mxu0 0.0
    %705 = vmatpush1.xpose.msra.mxu0 0.0
    %706 = vmatprep.subr.mxu0 0.0
    %707 = vmatpush1.xpose.msra.mxu0 0.0
    %708 = vmatprep.subr.mxu0 0.0
    %709 = vmatpush1.xpose.msra.mxu0 0.0
    %710 = vmatprep.subr.mxu0 0.0
    %711 = vmatpush1.xpose.msra.mxu0 0.0
    %712 = vmatprep.subr.mxu0 0.0
    %713 = vmatpush1.xpose.msra.mxu0 %v680
    %714 = vmatprep.subr.mxu0 0.0
    %715 = vmatpush2.xpose.msra.mxu0 0.0
    %716 = vmatprep.subr.mxu0 0.0
    %717 = vmatpush2.xpose.msra.mxu0 0.0
    %718 = vmatprep.subr.mxu0 0.0
    %719 = vmatpush2.xpose.msra.mxu0 0.0
    %720 = vmatprep.subr.mxu0 0.0
    %721 = vmatpush2.xpose.msra.mxu0 0.0
    %722 = vmatprep.subr.mxu0 0.0
    %723 = vmatpush2.xpose.msra.mxu0 0.0
    %724 = vmatprep.subr.mxu0 0.0
    %725 = vmatpush2.xpose.msra.mxu0 0.0
    %726 = vmatprep.subr.mxu0 0.0
    %727 = vmatpush2.xpose.msra.mxu0 0.0
    %728 = vmatprep.subr.mxu0 0.0
    %729 = vmatpush2.xpose.msra.mxu0 0.0
    %730 = vmatprep.subr.mxu0 0.0
    %731 = vmatpush2.xpose.msra.mxu0 0.0
    %732 = vmatprep.subr.mxu0 0.0
    %733 = vmatpush2.xpose.msra.mxu0 0.0
    %734 = vmatprep.subr.mxu0 0.0
    %735 = vmatpush2.xpose.msra.mxu0 0.0
    %736 = vmatprep.subr.mxu0 0.0
    %737 = vmatpush2.xpose.msra.mxu0 0.0
    %738 = vmatprep.subr.mxu0 0.0
    %739 = vmatpush2.xpose.msra.mxu0 0.0
    %740 = vmatprep.subr.mxu0 0.0
    %741 = vmatpush2.xpose.msra.mxu0 0.0
    %742 = vmatprep.subr.mxu0 0.0
    %743 = vmatpush2.xpose.msra.mxu0 0.0
    %744 = vmatprep.subr.mxu0 0.0
    %745 = vmatpush2.xpose.msra.mxu0 0.0
    %746 = vmatprep.mubr.f32.mxu0 0.0
    %747 = vmatmul.mubr.f32.gmra.mxu0 %v678
    %v748 = vpop.f32.mrf.mxu0
    %v749 = vadd.f32 0.0, %v748
    %v750 = vpop.f32.mrf.mxu0
    %751 = vdwg.mxu0
    %752 = vrot.lane.b32.xlu0 %v327, 112
    %v753 = vpop.permute.xlu0 %752
    %754 = vrot.lane.b32.xlu0 %v327, 80
    %v755 = vpop.permute.xlu0 %754
    %v756 = vsel %vm341, %v753, 0
    %v758 = vsel %vm341, %v755, 0
    %760 = vmatprep.subr.mxu0 0.0
    %761 = vmatpush1.xpose.msra.mxu0 0.0
    %762 = vmatprep.subr.mxu0 0.0
    %763 = vmatpush1.xpose.msra.mxu0 0.0
    %764 = vmatprep.subr.mxu0 0.0
    %765 = vmatpush1.xpose.msra.mxu0 0.0
    %766 = vmatprep.subr.mxu0 0.0
    %767 = vmatpush1.xpose.msra.mxu0 0.0
    %768 = vmatprep.subr.mxu0 0.0
    %769 = vmatpush1.xpose.msra.mxu0 0.0
    %770 = vmatprep.subr.mxu0 0.0
    %771 = vmatpush1.xpose.msra.mxu0 0.0
    %772 = vmatprep.subr.mxu0 0.0
    %773 = vmatpush1.xpose.msra.mxu0 0.0
    %774 = vmatprep.subr.mxu0 0.0
    %775 = vmatpush1.xpose.msra.mxu0 0.0
    %776 = vmatprep.subr.mxu0 0.0
    %777 = vmatpush1.xpose.msra.mxu0 0.0
    %778 = vmatprep.subr.mxu0 0.0
    %779 = vmatpush1.xpose.msra.mxu0 0.0
    %780 = vmatprep.subr.mxu0 0.0
    %781 = vmatpush1.xpose.msra.mxu0 0.0
    %782 = vmatprep.subr.mxu0 0.0
    %783 = vmatpush1.xpose.msra.mxu0 0.0
    %784 = vmatprep.subr.mxu0 0.0
    %785 = vmatpush1.xpose.msra.mxu0 0.0
    %786 = vmatprep.subr.mxu0 0.0
    %787 = vmatpush1.xpose.msra.mxu0 0.0
    %788 = vmatprep.subr.mxu0 0.0
    %789 = vmatpush1.xpose.msra.mxu0 0.0
    %790 = vmatprep.subr.mxu0 0.0
    %791 = vmatpush1.xpose.msra.mxu0 %v758
    %792 = vmatprep.subr.mxu0 0.0
    %793 = vmatpush2.xpose.msra.mxu0 0.0
    %794 = vmatprep.subr.mxu0 0.0
    %795 = vmatpush2.xpose.msra.mxu0 0.0
    %796 = vmatprep.subr.mxu0 0.0
    %797 = vmatpush2.xpose.msra.mxu0 0.0
    %798 = vmatprep.subr.mxu0 0.0
    %799 = vmatpush2.xpose.msra.mxu0 0.0
    %800 = vmatprep.subr.mxu0 0.0
    %801 = vmatpush2.xpose.msra.mxu0 0.0
    %802 = vmatprep.subr.mxu0 0.0
    %803 = vmatpush2.xpose.msra.mxu0 0.0
    %804 = vmatprep.subr.mxu0 0.0
    %805 = vmatpush2.xpose.msra.mxu0 0.0
    %806 = vmatprep.subr.mxu0 0.0
    %807 = vmatpush2.xpose.msra.mxu0 0.0
    %808 = vmatprep.subr.mxu0 0.0
    %809 = vmatpush2.xpose.msra.mxu0 0.0
    %810 = vmatprep.subr.mxu0 0.0
    %811 = vmatpush2.xpose.msra.mxu0 0.0
    %812 = vmatprep.subr.mxu0 0.0
    %813 = vmatpush2.xpose.msra.mxu0 0.0
    %814 = vmatprep.subr.mxu0 0.0
    %815 = vmatpush2.xpose.msra.mxu0 0.0
    %816 = vmatprep.subr.mxu0 0.0
    %817 = vmatpush2.xpose.msra.mxu0 0.0
    %818 = vmatprep.subr.mxu0 0.0
    %819 = vmatpush2.xpose.msra.mxu0 0.0
    %820 = vmatprep.subr.mxu0 0.0
    %821 = vmatpush2.xpose.msra.mxu0 0.0
    %822 = vmatprep.subr.mxu0 0.0
    %823 = vmatpush2.xpose.msra.mxu0 0.0
    %824 = vmatprep.mubr.f32.mxu0 0.0
    %825 = vmatmul.mubr.f32.gmra.mxu0 %v756
    %v826 = vpop.f32.mrf.mxu0
    %v827 = vadd.f32 0.0, %v826
    %v828 = vpop.f32.mrf.mxu0
    %829 = vdwg.mxu0
    %v830 = vmul.f32 %v749, 0.25
    %v831 = vmul.f32 %v827, 0.25
    %v832 = vadd.f32 %v830, %v42
    %v833 = vadd.f32 %v831, %v42
    %v834 = vmul.f32 %v832, 1.442695
    %v835 = vpow.pop %v834
    %v836 = vmul.f32 %v833, 1.442695
    %v837 = vpow.pop %v836
    %v838 = vsel %vm501, %v835, 0.0
    %839 = vadd.xlane.f32.xlu0 %v838
    %v840 = vpop.xlane.xlu0 %839
    %v841 = vsel %vm501, %v837, 0.0
    %842 = vadd.xlane.f32.xlu0 %v841
    %v843 = vpop.xlane.xlu0 %842
    %v844 = vrcp.pop %v840
    %v845 = vmul.f32 %v835, %v844
    %v846 = vrcp.pop %v843
    %v847 = vmul.f32 %v837, %v846
    %848 = vrot.lane.b32.xlu0 %v326, 32
    %v849 = vpop.permute.xlu0 %848
    %v852 = vsel %vm501, %v845, 0
    %854 = vmatprep.subr.mxu0 0.0
    %855 = vmatpush1.msra.mxu0 0.0
    %856 = vmatprep.subr.mxu0 0.0
    %857 = vmatpush1.msra.mxu0 0.0
    %858 = vmatprep.subr.mxu0 0.0
    %859 = vmatpush1.msra.mxu0 0.0
    %860 = vmatprep.subr.mxu0 0.0
    %861 = vmatpush1.msra.mxu0 0.0
    %862 = vmatprep.subr.mxu0 0.0
    %863 = vmatpush1.msra.mxu0 0.0
    %864 = vmatprep.subr.mxu0 0.0
    %865 = vmatpush1.msra.mxu0 0.0
    %866 = vmatprep.subr.mxu0 0.0
    %867 = vmatpush1.msra.mxu0 0.0
    %868 = vmatprep.subr.mxu0 0.0
    %869 = vmatpush1.msra.mxu0 0.0
    %870 = vmatprep.subr.mxu0 0.0
    %871 = vmatpush1.msra.mxu0 0.0
    %872 = vmatprep.subr.mxu0 0.0
    %873 = vmatpush1.msra.mxu0 0.0
    %874 = vmatprep.subr.mxu0 0.0
    %875 = vmatpush1.msra.mxu0 0.0
    %876 = vmatprep.subr.mxu0 0.0
    %877 = vmatpush1.msra.mxu0 0.0
    %878 = vmatprep.subr.mxu0 0.0
    %879 = vmatpush1.msra.mxu0 0.0
    %880 = vmatprep.subr.mxu0 0.0
    %881 = vmatpush1.msra.mxu0 0.0
    %882 = vmatprep.subr.mxu0 0.0
    %883 = vmatpush1.msra.mxu0 0.0
    %884 = vmatprep.subr.mxu0 0.0
    %885 = vmatpush1.msra.mxu0 %v849
    %886 = vmatprep.subr.mxu0 0.0
    %887 = vmatpush2.msra.mxu0 0.0
    %888 = vmatprep.subr.mxu0 0.0
    %889 = vmatpush2.msra.mxu0 0.0
    %890 = vmatprep.subr.mxu0 0.0
    %891 = vmatpush2.msra.mxu0 0.0
    %892 = vmatprep.subr.mxu0 0.0
    %893 = vmatpush2.msra.mxu0 0.0
    %894 = vmatprep.subr.mxu0 0.0
    %895 = vmatpush2.msra.mxu0 0.0
    %896 = vmatprep.subr.mxu0 0.0
    %897 = vmatpush2.msra.mxu0 0.0
    %898 = vmatprep.subr.mxu0 0.0
    %899 = vmatpush2.msra.mxu0 0.0
    %900 = vmatprep.subr.mxu0 0.0
    %901 = vmatpush2.msra.mxu0 0.0
    %902 = vmatprep.subr.mxu0 0.0
    %903 = vmatpush2.msra.mxu0 0.0
    %904 = vmatprep.subr.mxu0 0.0
    %905 = vmatpush2.msra.mxu0 0.0
    %906 = vmatprep.subr.mxu0 0.0
    %907 = vmatpush2.msra.mxu0 0.0
    %908 = vmatprep.subr.mxu0 0.0
    %909 = vmatpush2.msra.mxu0 0.0
    %910 = vmatprep.subr.mxu0 0.0
    %911 = vmatpush2.msra.mxu0 0.0
    %912 = vmatprep.subr.mxu0 0.0
    %913 = vmatpush2.msra.mxu0 0.0
    %914 = vmatprep.subr.mxu0 0.0
    %915 = vmatpush2.msra.mxu0 0.0
    %916 = vmatprep.subr.mxu0 0.0
    %917 = vmatpush2.msra.mxu0 0.0
    %918 = vmatprep.mubr.f32.mxu0 0.0
    %919 = vmatmul.mubr.f32.gmra.mxu0 %v852
    %v920 = vpop.f32.mrf.mxu0
    %v921 = vadd.f32 0.0, %v920
    %v922 = vpop.f32.mrf.mxu0
    %923 = vdwg.mxu0
    %924 = vrot.lane.b32.xlu0 %v327, 32
    %v925 = vpop.permute.xlu0 %924
    %v928 = vsel %vm501, %v847, 0
    %930 = vmatprep.subr.mxu0 0.0
    %931 = vmatpush1.msra.mxu0 0.0
    %932 = vmatprep.subr.mxu0 0.0
    %933 = vmatpush1.msra.mxu0 0.0
    %934 = vmatprep.subr.mxu0 0.0
    %935 = vmatpush1.msra.mxu0 0.0
    %936 = vmatprep.subr.mxu0 0.0
    %937 = vmatpush1.msra.mxu0 0.0
    %938 = vmatprep.subr.mxu0 0.0
    %939 = vmatpush1.msra.mxu0 0.0
    %940 = vmatprep.subr.mxu0 0.0
    %941 = vmatpush1.msra.mxu0 0.0
    %942 = vmatprep.subr.mxu0 0.0
    %943 = vmatpush1.msra.mxu0 0.0
    %944 = vmatprep.subr.mxu0 0.0
    %945 = vmatpush1.msra.mxu0 0.0
    %946 = vmatprep.subr.mxu0 0.0
    %947 = vmatpush1.msra.mxu0 0.0
    %948 = vmatprep.subr.mxu0 0.0
    %949 = vmatpush1.msra.mxu0 0.0
    %950 = vmatprep.subr.mxu0 0.0
    %951 = vmatpush1.msra.mxu0 0.0
    %952 = vmatprep.subr.mxu0 0.0
    %953 = vmatpush1.msra.mxu0 0.0
    %954 = vmatprep.subr.mxu0 0.0
    %955 = vmatpush1.msra.mxu0 0.0
    %956 = vmatprep.subr.mxu0 0.0
    %957 = vmatpush1.msra.mxu0 0.0
    %958 = vmatprep.subr.mxu0 0.0
    %959 = vmatpush1.msra.mxu0 0.0
    %960 = vmatprep.subr.mxu0 0.0
    %961 = vmatpush1.msra.mxu0 %v925
    %962 = vmatprep.subr.mxu0 0.0
    %963 = vmatpush2.msra.mxu0 0.0
    %964 = vmatprep.subr.mxu0 0.0
    %965 = vmatpush2.msra.mxu0 0.0
    %966 = vmatprep.subr.mxu0 0.0
    %967 = vmatpush2.msra.mxu0 0.0
    %968 = vmatprep.subr.mxu0 0.0
    %969 = vmatpush2.msra.mxu0 0.0
    %970 = vmatprep.subr.mxu0 0.0
    %971 = vmatpush2.msra.mxu0 0.0
    %972 = vmatprep.subr.mxu0 0.0
    %973 = vmatpush2.msra.mxu0 0.0
    %974 = vmatprep.subr.mxu0 0.0
    %975 = vmatpush2.msra.mxu0 0.0
    %976 = vmatprep.subr.mxu0 0.0
    %977 = vmatpush2.msra.mxu0 0.0
    %978 = vmatprep.subr.mxu0 0.0
    %979 = vmatpush2.msra.mxu0 0.0
    %980 = vmatprep.subr.mxu0 0.0
    %981 = vmatpush2.msra.mxu0 0.0
    %982 = vmatprep.subr.mxu0 0.0
    %983 = vmatpush2.msra.mxu0 0.0
    %984 = vmatprep.subr.mxu0 0.0
    %985 = vmatpush2.msra.mxu0 0.0
    %986 = vmatprep.subr.mxu0 0.0
    %987 = vmatpush2.msra.mxu0 0.0
    %988 = vmatprep.subr.mxu0 0.0
    %989 = vmatpush2.msra.mxu0 0.0
    %990 = vmatprep.subr.mxu0 0.0
    %991 = vmatpush2.msra.mxu0 0.0
    %992 = vmatprep.subr.mxu0 0.0
    %993 = vmatpush2.msra.mxu0 0.0
    %994 = vmatprep.mubr.f32.mxu0 0.0
    %995 = vmatmul.mubr.f32.gmra.mxu0 %v928
    %v996 = vpop.f32.mrf.mxu0
    %v997 = vadd.f32 0.0, %v996
    %v998 = vpop.f32.mrf.mxu0
    %999 = vdwg.mxu0
    %1002 = vrot.lane.b32.xlu0 %v921, 32
    %v1003 = vpop.permute.xlu0 %1002
    %1004 = vrot.lane.b32.xlu0 %v997, 32
    %v1005 = vpop.permute.xlu0 %1004
    %v1008 = vadd.f32 %v672, %v1003
    %v1009 = vadd.f32 %v673, %v1005
    %1012 = vrot.lane.b32.xlu0 %v1008, 96
    %v1013 = vpop.permute.xlu0 %1012
    %1014 = vrot.lane.b32.xlu0 %v1009, 96
    %v1015 = vpop.permute.xlu0 %1014
    %v1018 = vsel %vm67, %v1013, 0.0
    %1019 = vadd.xlane.f32.xlu0 %v1018
    %v1020 = vpop.xlane.xlu0 %1019
    %v1021 = vsel %vm67, %v1015, 0.0
    %1022 = vadd.xlane.f32.xlu0 %v1021
    %v1023 = vpop.xlane.xlu0 %1022
    %v1024 = vmul.f32 %v1020, %v74
    %v1025 = vmul.f32 %v1023, %v74
    %v1026 = vsub.f32 %v1008, %v1024
    %v1027 = vsub.f32 %v1009, %v1025
    %v1028 = vmul.f32 %v1026, %v1026
    %v1029 = vmul.f32 %v1027, %v1027
    %1032 = vrot.lane.b32.xlu0 %v1028, 96
    %v1033 = vpop.permute.xlu0 %1032
    %1034 = vrot.lane.b32.xlu0 %v1029, 96
    %v1035 = vpop.permute.xlu0 %1034
    %v1038 = vsel %vm67, %v1033, 0.0
    %1039 = vadd.xlane.f32.xlu0 %v1038
    %v1040 = vpop.xlane.xlu0 %1039
    %v1041 = vsel %vm67, %v1035, 0.0
    %1042 = vadd.xlane.f32.xlu0 %v1041
    %v1043 = vpop.xlane.xlu0 %1042
    %v1044 = vmul.f32 %v1040, %v74
    %v1045 = vmul.f32 %v1043, %v74
    %v1046 = vadd.f32 %v1044, 1e-12
    %v1047 = vadd.f32 %v1045, 1e-12
    %v1048 = vrsqrt.pop %v1046
    %v1049 = vrsqrt.pop %v1047
    %v1050 = vmul.f32 %v1026, %v1048
    %v1051 = vmul.f32 %v1027, %v1049
    %1052 = vrot.lane.b32.xlu0 %v331, 32
    %v1053 = vpop.permute.xlu0 %1052
    %v1055 = vmul.f32 %v1050, %v1053
    %v1056 = vmul.f32 %v1051, %v1053
    %v1057 = vadd.f32 %v1055, %v331
    %v1058 = vadd.f32 %v1056, %v331
    %v1059 = vlaneseq
    %v1060 = vshrl.u32 %v1059, 7
    %v1061 = vsub.s32 0, %v1060
    %v1062 = vrot.slane %v46, %v1061
    %1065 = vrot.lane.b32.xlu0 %v1057, 96
    %v1066 = vpop.permute.xlu0 %1065
    %1067 = vrot.lane.b32.xlu0 %v1058, 96
    %v1068 = vpop.permute.xlu0 %1067
    %v1069 = vsel %vm67, %v1066, 0
    %v1071 = vsel %vm67, %v1068, 0
    %1073 = vmatprep.subr.mxu0 0.0
    %1074 = vmatpush1.msra.mxu0 0.0
    %1075 = vmatprep.subr.mxu0 0.0
    %1076 = vmatpush1.msra.mxu0 0.0
    %1077 = vmatprep.subr.mxu0 0.0
    %1078 = vmatpush1.msra.mxu0 0.0
    %1079 = vmatprep.subr.mxu0 0.0
    %1080 = vmatpush1.msra.mxu0 0.0
    %1081 = vmatprep.subr.mxu0 0.0
    %1082 = vmatpush1.msra.mxu0 0.0
    %1083 = vmatprep.subr.mxu0 0.0
    %1084 = vmatpush1.msra.mxu0 0.0
    %1085 = vmatprep.subr.mxu0 0.0
    %1086 = vmatpush1.msra.mxu0 0.0
    %1087 = vmatprep.subr.mxu0 0.0
    %1088 = vmatpush1.msra.mxu0 0.0
    %1089 = vmatprep.subr.mxu0 0.0
    %1090 = vmatpush1.msra.mxu0 0.0
    %1091 = vmatprep.subr.mxu0 0.0
    %1092 = vmatpush1.msra.mxu0 0.0
    %1093 = vmatprep.subr.mxu0 0.0
    %1094 = vmatpush1.msra.mxu0 0.0
    %1095 = vmatprep.subr.mxu0 0.0
    %1096 = vmatpush1.msra.mxu0 0.0
    %1097 = vmatprep.subr.mxu0 0.0
    %1098 = vmatpush1.msra.mxu0 %v58
    %1099 = vmatprep.subr.mxu0 0.0
    %1100 = vmatpush1.msra.mxu0 %v57
    %1101 = vmatprep.subr.mxu0 0.0
    %1102 = vmatpush1.msra.mxu0 %v56
    %1103 = vmatprep.subr.mxu0 0.0
    %1104 = vmatpush1.msra.mxu0 %v55
    %1105 = vmatprep.subr.mxu0 0.0
    %1106 = vmatpush2.msra.mxu0 0.0
    %1107 = vmatprep.subr.mxu0 0.0
    %1108 = vmatpush2.msra.mxu0 0.0
    %1109 = vmatprep.subr.mxu0 0.0
    %1110 = vmatpush2.msra.mxu0 0.0
    %1111 = vmatprep.subr.mxu0 0.0
    %1112 = vmatpush2.msra.mxu0 0.0
    %1113 = vmatprep.subr.mxu0 0.0
    %1114 = vmatpush2.msra.mxu0 0.0
    %1115 = vmatprep.subr.mxu0 0.0
    %1116 = vmatpush2.msra.mxu0 0.0
    %1117 = vmatprep.subr.mxu0 0.0
    %1118 = vmatpush2.msra.mxu0 0.0
    %1119 = vmatprep.subr.mxu0 0.0
    %1120 = vmatpush2.msra.mxu0 0.0
    %1121 = vmatprep.subr.mxu0 0.0
    %1122 = vmatpush2.msra.mxu0 0.0
    %1123 = vmatprep.subr.mxu0 0.0
    %1124 = vmatpush2.msra.mxu0 0.0
    %1125 = vmatprep.subr.mxu0 0.0
    %1126 = vmatpush2.msra.mxu0 0.0
    %1127 = vmatprep.subr.mxu0 0.0
    %1128 = vmatpush2.msra.mxu0 0.0
    %1129 = vmatprep.subr.mxu0 0.0
    %1130 = vmatpush2.msra.mxu0 0.0
    %1131 = vmatprep.subr.mxu0 0.0
    %1132 = vmatpush2.msra.mxu0 0.0
    %1133 = vmatprep.subr.mxu0 0.0
    %1134 = vmatpush2.msra.mxu0 0.0
    %1135 = vmatprep.subr.mxu0 0.0
    %1136 = vmatpush2.msra.mxu0 0.0
    %1137 = vmatprep.mubr.f32.mxu0 0.0
    %1138 = vmatmul.mubr.f32.gmra.mxu0 %v1069
    %v1139 = vpop.f32.mrf.mxu0
    %v1140 = vadd.f32 %v1062, %v1139
    %v1141 = vpop.f32.mrf.mxu0
    %1142 = vmatprep.mubr.f32.mxu0 0.0
    %1143 = vmatmul.mubr.f32.gmra.mxu0 %v1071
    %v1144 = vpop.f32.mrf.mxu0
    %v1145 = vadd.f32 %v1062, %v1144
    %v1146 = vpop.f32.mrf.mxu0
    %1147 = vdwg.mxu0
    %v1148 = vmul.f32 %v1140, 0.5
    %v1149 = vmul.f32 %v1145, 0.5
    %v1150 = vmul.f32 %v1140, 0.70710677
    %v1151 = vmul.f32 %v1145, 0.70710677
    %v1152 = verf.f32.pop %v1150
    %v1153 = verf.f32.pop %v1151
    %v1154 = vadd.f32 %v1152, 1.0
    %v1155 = vadd.f32 %v1153, 1.0
    %v1156 = vmul.f32 %v1148, %v1154
    %v1157 = vmul.f32 %v1149, %v1155
    %vm1158 = vcmask 523264
    %v1160 = vsel %vm1158, %v1156, 0
    %v1163 = vsel %vm1158, %v1157, 0
    %1165 = vmatprep.subr.mxu0 0.0
    %1166 = vmatpush1.msra.mxu0 0.0
    %1167 = vmatprep.subr.mxu0 0.0
    %1168 = vmatpush1.msra.mxu0 0.0
    %1169 = vmatprep.subr.mxu0 0.0
    %1170 = vmatpush1.msra.mxu0 0.0
    %1171 = vmatprep.subr.mxu0 0.0
    %1172 = vmatpush1.msra.mxu0 0.0
    %1173 = vmatprep.subr.mxu0 0.0
    %1174 = vmatpush1.msra.mxu0 0.0
    %1175 = vmatprep.subr.mxu0 0.0
    %1176 = vmatpush1.msra.mxu0 0.0
    %1177 = vmatprep.subr.mxu0 0.0
    %1178 = vmatpush1.msra.mxu0 0.0
    %1179 = vmatprep.subr.mxu0 0.0
    %1180 = vmatpush1.msra.mxu0 0.0
    %1181 = vmatprep.subr.mxu0 0.0
    %1182 = vmatpush1.msra.mxu0 %v66
    %1183 = vmatprep.subr.mxu0 0.0
    %1184 = vmatpush1.msra.mxu0 %v65
    %1185 = vmatprep.subr.mxu0 0.0
    %1186 = vmatpush1.msra.mxu0 %v64
    %1187 = vmatprep.subr.mxu0 0.0
    %1188 = vmatpush1.msra.mxu0 %v63
    %1189 = vmatprep.subr.mxu0 0.0
    %1190 = vmatpush1.msra.mxu0 %v62
    %1191 = vmatprep.subr.mxu0 0.0
    %1192 = vmatpush1.msra.mxu0 %v61
    %1193 = vmatprep.subr.mxu0 0.0
    %1194 = vmatpush1.msra.mxu0 %v60
    %1195 = vmatprep.subr.mxu0 0.0
    %1196 = vmatpush1.msra.mxu0 %v59
    %1197 = vmatprep.subr.mxu0 0.0
    %1198 = vmatpush2.msra.mxu0 0.0
    %1199 = vmatprep.subr.mxu0 0.0
    %1200 = vmatpush2.msra.mxu0 0.0
    %1201 = vmatprep.subr.mxu0 0.0
    %1202 = vmatpush2.msra.mxu0 0.0
    %1203 = vmatprep.subr.mxu0 0.0
    %1204 = vmatpush2.msra.mxu0 0.0
    %1205 = vmatprep.subr.mxu0 0.0
    %1206 = vmatpush2.msra.mxu0 0.0
    %1207 = vmatprep.subr.mxu0 0.0
    %1208 = vmatpush2.msra.mxu0 0.0
    %1209 = vmatprep.subr.mxu0 0.0
    %1210 = vmatpush2.msra.mxu0 0.0
    %1211 = vmatprep.subr.mxu0 0.0
    %1212 = vmatpush2.msra.mxu0 0.0
    %1213 = vmatprep.subr.mxu0 0.0
    %1214 = vmatpush2.msra.mxu0 0.0
    %1215 = vmatprep.subr.mxu0 0.0
    %1216 = vmatpush2.msra.mxu0 0.0
    %1217 = vmatprep.subr.mxu0 0.0
    %1218 = vmatpush2.msra.mxu0 0.0
    %1219 = vmatprep.subr.mxu0 0.0
    %1220 = vmatpush2.msra.mxu0 0.0
    %1221 = vmatprep.subr.mxu0 0.0
    %1222 = vmatpush2.msra.mxu0 0.0
    %1223 = vmatprep.subr.mxu0 0.0
    %1224 = vmatpush2.msra.mxu0 0.0
    %1225 = vmatprep.subr.mxu0 0.0
    %1226 = vmatpush2.msra.mxu0 0.0
    %1227 = vmatprep.subr.mxu0 0.0
    %1228 = vmatpush2.msra.mxu0 0.0
    %1229 = vmatprep.mubr.f32.mxu0 0.0
    %1230 = vmatmul.mubr.f32.gmra.mxu0 %v1160
    %v1231 = vpop.f32.mrf.mxu0
    %v1232 = vadd.f32 %v1053, %v1231
    %v1233 = vpop.f32.mrf.mxu0
    %1234 = vmatprep.mubr.f32.mxu0 0.0
    %1235 = vmatmul.mubr.f32.gmra.mxu0 %v1163
    %v1236 = vpop.f32.mrf.mxu0
    %v1237 = vadd.f32 %v1053, %v1236
    %v1238 = vpop.f32.mrf.mxu0
    %1239 = vdwg.mxu0
    %v1242 = vadd.f32 %v1232, %v1066
    %v1243 = vadd.f32 %v1237, %v1068
    %s1244 = scalar_lea.vmem [#allocation5], 168
    %v1245 = vld [vmem:[%s1244] sm:$0x1]
    %v1246 = vld [vmem:[%s1244 + $0x1] sm:$0x1]
    %v1247 = vld [vmem:[%s1244 + $0x2] sm:$0x1]
    %v1248 = vld [vmem:[%s1244 + $0x3] sm:$0x1]
    %v1249 = vld [vmem:[%s1244 + $0x4] sm:$0xff]
    %v1250 = vld [vmem:[%s1244 + $0xc] sm:$0xff]
    %v1251 = vld [vmem:[%s1244 + $0x14] sm:$0xff]
    %v1252 = vld [vmem:[%s1244 + $0x1c] sm:$0xff]
    %v1253 = vld [vmem:[%s1244 + $0x24] sm:$0xff]
    %v1254 = vld [vmem:[%s1244 + $0x2c] sm:$0xff]
    %v1255 = vld [vmem:[%s1244 + $0x34] sm:$0xff]
    %v1256 = vld [vmem:[%s1244 + $0x3c] sm:$0xff]
    %v1257 = vld [vmem:[%s1244 + $0x44] sm:$0xff]
    %v1258 = vld [vmem:[%s1244 + $0x4c] sm:$0xff]
    %v1259 = vld [vmem:[%s1244 + $0x54] sm:$0xff]
    %v1260 = vld [vmem:[%s1244 + $0x5c] sm:$0xff]
    %v1261 = vld [vmem:[%s1244 + $0x64] sm:$0xff]
    %v1262 = vld [vmem:[%s1244 + $0x6c] sm:$0xff]
    %v1263 = vld [vmem:[%s1244 + $0x74] sm:$0xff]
    %v1264 = vld [vmem:[%s1244 + $0x7c] sm:$0xff]
    %v1265 = vld [vmem:[%s1244 + $0x84] sm:$0xff]
    %v1266 = vld [vmem:[%s1244 + $0x8c] sm:$0xff]
    %v1267 = vld [vmem:[%s1244 + $0x94] sm:$0xff]
    %v1268 = vld [vmem:[%s1244 + $0x9c] sm:$0xff]
    %v1269 = vlaneseq
    %v1270 = vshrl.u32 %v1269, 7
    %v1271 = vsub.s32 0, %v1270
    %v1272 = vrot.slane %v1245, %v1271
    %v1273 = vmul.f32 %v93, %v1272
    %v1274 = vmul.f32 %v94, %v1272
    %1276 = vrot.lane.b32.xlu0 %v1272, 96
    %v1277 = vpop.permute.xlu0 %1276
    %v1279 = vadd.f32 %v1273, %v1277
    %v1280 = vadd.f32 %v1274, %v1277
    %v1281 = vsel %vm67, %v1242, 0.0
    %1282 = vadd.xlane.f32.xlu0 %v1281
    %v1283 = vpop.xlane.xlu0 %1282
    %v1284 = vsel %vm67, %v1243, 0.0
    %1285 = vadd.xlane.f32.xlu0 %v1284
    %v1286 = vpop.xlane.xlu0 %1285
    %v1287 = vmul.f32 %v1283, %v74
    %v1288 = vmul.f32 %v1286, %v74
    %v1289 = vsub.f32 %v1242, %v1287
    %v1290 = vsub.f32 %v1243, %v1288
    %v1291 = vmul.f32 %v1289, %v1289
    %v1292 = vmul.f32 %v1290, %v1290
    %v1293 = vsel %vm67, %v1291, 0.0
    %1294 = vadd.xlane.f32.xlu0 %v1293
    %v1295 = vpop.xlane.xlu0 %1294
    %v1296 = vsel %vm67, %v1292, 0.0
    %1297 = vadd.xlane.f32.xlu0 %v1296
    %v1298 = vpop.xlane.xlu0 %1297
    %v1299 = vmul.f32 %v1295, %v74
    %v1300 = vmul.f32 %v1298, %v74
    %v1301 = vadd.f32 %v1299, 1e-12
    %v1302 = vadd.f32 %v1300, 1e-12
    %v1303 = vrsqrt.pop %v1301
    %v1304 = vrsqrt.pop %v1302
    %v1305 = vmul.f32 %v1289, %v1303
    %v1306 = vmul.f32 %v1290, %v1304
    %1307 = vrot.lane.b32.xlu0 %v1272, 64
    %v1308 = vpop.permute.xlu0 %1307
    %v1310 = vmul.f32 %v1305, %v1308
    %v1311 = vmul.f32 %v1306, %v1308
    %1312 = vrot.lane.b32.xlu0 %v1272, 32
    %v1313 = vpop.permute.xlu0 %1312
    %v1315 = vadd.f32 %v1310, %v1313
    %v1316 = vadd.f32 %v1311, %v1313
    %v1318 = vsel %vm67, %v1315, 0
    %v1321 = vsel %vm67, %v1316, 0
    %1323 = vmatprep.subr.mxu0 0.0
    %1324 = vmatpush1.msra.mxu0 0.0
    %1325 = vmatprep.subr.mxu0 0.0
    %1326 = vmatpush1.msra.mxu0 0.0
    %1327 = vmatprep.subr.mxu0 0.0
    %1328 = vmatpush1.msra.mxu0 0.0
    %1329 = vmatprep.subr.mxu0 0.0
    %1330 = vmatpush1.msra.mxu0 0.0
    %1331 = vmatprep.subr.mxu0 0.0
    %1332 = vmatpush1.msra.mxu0 0.0
    %1333 = vmatprep.subr.mxu0 0.0
    %1334 = vmatpush1.msra.mxu0 0.0
    %1335 = vmatprep.subr.mxu0 0.0
    %1336 = vmatpush1.msra.mxu0 0.0
    %1337 = vmatprep.subr.mxu0 0.0
    %1338 = vmatpush1.msra.mxu0 0.0
    %1339 = vmatprep.subr.mxu0 0.0
    %1340 = vmatpush1.msra.mxu0 0.0
    %1341 = vmatprep.subr.mxu0 0.0
    %1342 = vmatpush1.msra.mxu0 0.0
    %1343 = vmatprep.subr.mxu0 0.0
    %1344 = vmatpush1.msra.mxu0 0.0
    %1345 = vmatprep.subr.mxu0 0.0
    %1346 = vmatpush1.msra.mxu0 0.0
    %1347 = vmatprep.subr.mxu0 0.0
    %1348 = vmatpush1.msra.mxu0 %v1256
    %1349 = vmatprep.subr.mxu0 0.0
    %1350 = vmatpush1.msra.mxu0 %v1255
    %1351 = vmatprep.subr.mxu0 0.0
    %1352 = vmatpush1.msra.mxu0 %v1254
    %1353 = vmatprep.subr.mxu0 0.0
    %1354 = vmatpush1.msra.mxu0 %v1253
    %1355 = vmatprep.subr.mxu0 0.0
    %1356 = vmatpush2.msra.mxu0 0.0
    %1357 = vmatprep.subr.mxu0 0.0
    %1358 = vmatpush2.msra.mxu0 0.0
    %1359 = vmatprep.subr.mxu0 0.0
    %1360 = vmatpush2.msra.mxu0 0.0
    %1361 = vmatprep.subr.mxu0 0.0
    %1362 = vmatpush2.msra.mxu0 0.0
    %1363 = vmatprep.subr.mxu0 0.0
    %1364 = vmatpush2.msra.mxu0 0.0
    %1365 = vmatprep.subr.mxu0 0.0
    %1366 = vmatpush2.msra.mxu0 0.0
    %1367 = vmatprep.subr.mxu0 0.0
    %1368 = vmatpush2.msra.mxu0 0.0
    %1369 = vmatprep.subr.mxu0 0.0
    %1370 = vmatpush2.msra.mxu0 0.0
    %1371 = vmatprep.subr.mxu0 0.0
    %1372 = vmatpush2.msra.mxu0 0.0
    %1373 = vmatprep.subr.mxu0 0.0
    %1374 = vmatpush2.msra.mxu0 0.0
    %1375 = vmatprep.subr.mxu0 0.0
    %1376 = vmatpush2.msra.mxu0 0.0
    %1377 = vmatprep.subr.mxu0 0.0
    %1378 = vmatpush2.msra.mxu0 0.0
    %1379 = vmatprep.subr.mxu0 0.0
    %1380 = vmatpush2.msra.mxu0 0.0
    %1381 = vmatprep.subr.mxu0 0.0
    %1382 = vmatpush2.msra.mxu0 0.0
    %1383 = vmatprep.subr.mxu0 0.0
    %1384 = vmatpush2.msra.mxu0 0.0
    %1385 = vmatprep.subr.mxu0 0.0
    %1386 = vmatpush2.msra.mxu0 0.0
    %1387 = vmatprep.mubr.f32.mxu0 0.0
    %1388 = vmatmul.mubr.f32.gmra.mxu0 %v1318
    %v1389 = vpop.f32.mrf.mxu0
    %v1390 = vadd.f32 0.0, %v1389
    %v1391 = vpop.f32.mrf.mxu0
    %1392 = vmatprep.mubr.f32.mxu0 0.0
    %1393 = vmatmul.mubr.f32.gmra.mxu0 %v1321
    %v1394 = vpop.f32.mrf.mxu0
    %v1395 = vadd.f32 0.0, %v1394
    %v1396 = vpop.f32.mrf.mxu0
    %1397 = vdwg.mxu0
    %v1399 = vsel %vm67, %v1279, 0
    %v1402 = vsel %vm67, %v1280, 0
    %1404 = vmatprep.subr.mxu0 0.0
    %1405 = vmatpush1.msra.mxu0 0.0
    %1406 = vmatprep.subr.mxu0 0.0
    %1407 = vmatpush1.msra.mxu0 0.0
    %1408 = vmatprep.subr.mxu0 0.0
    %1409 = vmatpush1.msra.mxu0 0.0
    %1410 = vmatprep.subr.mxu0 0.0
    %1411 = vmatpush1.msra.mxu0 0.0
    %1412 = vmatprep.subr.mxu0 0.0
    %1413 = vmatpush1.msra.mxu0 0.0
    %1414 = vmatprep.subr.mxu0 0.0
    %1415 = vmatpush1.msra.mxu0 0.0
    %1416 = vmatprep.subr.mxu0 0.0
    %1417 = vmatpush1.msra.mxu0 0.0
    %1418 = vmatprep.subr.mxu0 0.0
    %1419 = vmatpush1.msra.mxu0 0.0
    %1420 = vmatprep.subr.mxu0 0.0
    %1421 = vmatpush1.msra.mxu0 0.0
    %1422 = vmatprep.subr.mxu0 0.0
    %1423 = vmatpush1.msra.mxu0 0.0
    %1424 = vmatprep.subr.mxu0 0.0
    %1425 = vmatpush1.msra.mxu0 0.0
    %1426 = vmatprep.subr.mxu0 0.0
    %1427 = vmatpush1.msra.mxu0 0.0
    %1428 = vmatprep.subr.mxu0 0.0
    %1429 = vmatpush1.msra.mxu0 %v1252
    %1430 = vmatprep.subr.mxu0 0.0
    %1431 = vmatpush1.msra.mxu0 %v1251
    %1432 = vmatprep.subr.mxu0 0.0
    %1433 = vmatpush1.msra.mxu0 %v1250
    %1434 = vmatprep.subr.mxu0 0.0
    %1435 = vmatpush1.msra.mxu0 %v1249
    %1436 = vmatprep.subr.mxu0 0.0
    %1437 = vmatpush2.msra.mxu0 0.0
    %1438 = vmatprep.subr.mxu0 0.0
    %1439 = vmatpush2.msra.mxu0 0.0
    %1440 = vmatprep.subr.mxu0 0.0
    %1441 = vmatpush2.msra.mxu0 0.0
    %1442 = vmatprep.subr.mxu0 0.0
    %1443 = vmatpush2.msra.mxu0 0.0
    %1444 = vmatprep.subr.mxu0 0.0
    %1445 = vmatpush2.msra.mxu0 0.0
    %1446 = vmatprep.subr.mxu0 0.0
    %1447 = vmatpush2.msra.mxu0 0.0
    %1448 = vmatprep.subr.mxu0 0.0
    %1449 = vmatpush2.msra.mxu0 0.0
    %1450 = vmatprep.subr.mxu0 0.0
    %1451 = vmatpush2.msra.mxu0 0.0
    %1452 = vmatprep.subr.mxu0 0.0
    %1453 = vmatpush2.msra.mxu0 0.0
    %1454 = vmatprep.subr.mxu0 0.0
    %1455 = vmatpush2.msra.mxu0 0.0
    %1456 = vmatprep.subr.mxu0 0.0
    %1457 = vmatpush2.msra.mxu0 0.0
    %1458 = vmatprep.subr.mxu0 0.0
    %1459 = vmatpush2.msra.mxu0 0.0
    %1460 = vmatprep.subr.mxu0 0.0
    %1461 = vmatpush2.msra.mxu0 0.0
    %1462 = vmatprep.subr.mxu0 0.0
    %1463 = vmatpush2.msra.mxu0 0.0
    %1464 = vmatprep.subr.mxu0 0.0
    %1465 = vmatpush2.msra.mxu0 0.0
    %1466 = vmatprep.subr.mxu0 0.0
    %1467 = vmatpush2.msra.mxu0 0.0
    %1468 = vmatprep.mubr.f32.mxu0 0.0
    %1469 = vmatmul.mubr.f32.gmra.mxu0 %v1399
    %v1470 = vpop.f32.mrf.mxu0
    %v1471 = vadd.f32 %v1390, %v1470
    %v1472 = vpop.f32.mrf.mxu0
    %1473 = vmatprep.mubr.f32.mxu0 0.0
    %1474 = vmatmul.mubr.f32.gmra.mxu0 %v1402
    %v1475 = vpop.f32.mrf.mxu0
    %v1476 = vadd.f32 %v1395, %v1475
    %v1477 = vpop.f32.mrf.mxu0
    %1478 = vdwg.mxu0
    %v1479 = vlaneseq
    %v1480 = vshrl.u32 %v1479, 7
    %v1481 = vsub.s32 0, %v1480
    %v1482 = vrot.slane %v1247, %v1481
    %v1483 = vadd.f32 %v1471, %v1482
    %v1484 = vadd.f32 %v1476, %v1482
    %v1485 = vlaneseq
    %v1486 = vshrl.u32 %v1485, 7
    %v1487 = vsub.s32 0, %v1486
    %v1488 = vrot.slane %v1246, %v1487
    %1490 = vrot.lane.b32.xlu0 %v1488, 64
    %v1491 = vpop.permute.xlu0 %1490
    %v1493 = vadd.f32 %v1315, %v1491
    %v1494 = vadd.f32 %v1316, %v1491
    %1496 = vrot.lane.b32.xlu0 %v1483, 96
    %v1497 = vpop.permute.xlu0 %1496
    %v1498 = vsel %vm341, %v1483, 0
    %v1500 = vsel %vm341, %v1497, 0
    %1502 = vmatprep.subr.mxu0 0.0
    %1503 = vmatpush1.xpose.msra.mxu0 0.0
    %1504 = vmatprep.subr.mxu0 0.0
    %1505 = vmatpush1.xpose.msra.mxu0 0.0
    %1506 = vmatprep.subr.mxu0 0.0
    %1507 = vmatpush1.xpose.msra.mxu0 0.0
    %1508 = vmatprep.subr.mxu0 0.0
    %1509 = vmatpush1.xpose.msra.mxu0 0.0
    %1510 = vmatprep.subr.mxu0 0.0
    %1511 = vmatpush1.xpose.msra.mxu0 0.0
    %1512 = vmatprep.subr.mxu0 0.0
    %1513 = vmatpush1.xpose.msra.mxu0 0.0
    %1514 = vmatprep.subr.mxu0 0.0
    %1515 = vmatpush1.xpose.msra.mxu0 0.0
    %1516 = vmatprep.subr.mxu0 0.0
    %1517 = vmatpush1.xpose.msra.mxu0 0.0
    %1518 = vmatprep.subr.mxu0 0.0
    %1519 = vmatpush1.xpose.msra.mxu0 0.0
    %1520 = vmatprep.subr.mxu0 0.0
    %1521 = vmatpush1.xpose.msra.mxu0 0.0
    %1522 = vmatprep.subr.mxu0 0.0
    %1523 = vmatpush1.xpose.msra.mxu0 0.0
    %1524 = vmatprep.subr.mxu0 0.0
    %1525 = vmatpush1.xpose.msra.mxu0 0.0
    %1526 = vmatprep.subr.mxu0 0.0
    %1527 = vmatpush1.xpose.msra.mxu0 0.0
    %1528 = vmatprep.subr.mxu0 0.0
    %1529 = vmatpush1.xpose.msra.mxu0 0.0
    %1530 = vmatprep.subr.mxu0 0.0
    %1531 = vmatpush1.xpose.msra.mxu0 0.0
    %1532 = vmatprep.subr.mxu0 0.0
    %1533 = vmatpush1.xpose.msra.mxu0 %v1500
    %1534 = vmatprep.subr.mxu0 0.0
    %1535 = vmatpush2.xpose.msra.mxu0 0.0
    %1536 = vmatprep.subr.mxu0 0.0
    %1537 = vmatpush2.xpose.msra.mxu0 0.0
    %1538 = vmatprep.subr.mxu0 0.0
    %1539 = vmatpush2.xpose.msra.mxu0 0.0
    %1540 = vmatprep.subr.mxu0 0.0
    %1541 = vmatpush2.xpose.msra.mxu0 0.0
    %1542 = vmatprep.subr.mxu0 0.0
    %1543 = vmatpush2.xpose.msra.mxu0 0.0
    %1544 = vmatprep.subr.mxu0 0.0
    %1545 = vmatpush2.xpose.msra.mxu0 0.0
    %1546 = vmatprep.subr.mxu0 0.0
    %1547 = vmatpush2.xpose.msra.mxu0 0.0
    %1548 = vmatprep.subr.mxu0 0.0
    %1549 = vmatpush2.xpose.msra.mxu0 0.0
    %1550 = vmatprep.subr.mxu0 0.0
    %1551 = vmatpush2.xpose.msra.mxu0 0.0
    %1552 = vmatprep.subr.mxu0 0.0
    %1553 = vmatpush2.xpose.msra.mxu0 0.0
    %1554 = vmatprep.subr.mxu0 0.0
    %1555 = vmatpush2.xpose.msra.mxu0 0.0
    %1556 = vmatprep.subr.mxu0 0.0
    %1557 = vmatpush2.xpose.msra.mxu0 0.0
    %1558 = vmatprep.subr.mxu0 0.0
    %1559 = vmatpush2.xpose.msra.mxu0 0.0
    %1560 = vmatprep.subr.mxu0 0.0
    %1561 = vmatpush2.xpose.msra.mxu0 0.0
    %1562 = vmatprep.subr.mxu0 0.0
    %1563 = vmatpush2.xpose.msra.mxu0 0.0
    %1564 = vmatprep.subr.mxu0 0.0
    %1565 = vmatpush2.xpose.msra.mxu0 0.0
    %1566 = vmatprep.mubr.f32.mxu0 0.0
    %1567 = vmatmul.mubr.f32.gmra.mxu0 %v1498
    %v1568 = vpop.f32.mrf.mxu0
    %v1569 = vadd.f32 0.0, %v1568
    %v1570 = vpop.f32.mrf.mxu0
    %1571 = vdwg.mxu0
    %1573 = vrot.lane.b32.xlu0 %v1484, 96
    %v1574 = vpop.permute.xlu0 %1573
    %v1575 = vsel %vm341, %v1484, 0
    %v1577 = vsel %vm341, %v1574, 0
    %1579 = vmatprep.subr.mxu0 0.0
    %1580 = vmatpush1.xpose.msra.mxu0 0.0
    %1581 = vmatprep.subr.mxu0 0.0
    %1582 = vmatpush1.xpose.msra.mxu0 0.0
    %1583 = vmatprep.subr.mxu0 0.0
    %1584 = vmatpush1.xpose.msra.mxu0 0.0
    %1585 = vmatprep.subr.mxu0 0.0
    %1586 = vmatpush1.xpose.msra.mxu0 0.0
    %1587 = vmatprep.subr.mxu0 0.0
    %1588 = vmatpush1.xpose.msra.mxu0 0.0
    %1589 = vmatprep.subr.mxu0 0.0
    %1590 = vmatpush1.xpose.msra.mxu0 0.0
    %1591 = vmatprep.subr.mxu0 0.0
    %1592 = vmatpush1.xpose.msra.mxu0 0.0
    %1593 = vmatprep.subr.mxu0 0.0
    %1594 = vmatpush1.xpose.msra.mxu0 0.0
    %1595 = vmatprep.subr.mxu0 0.0
    %1596 = vmatpush1.xpose.msra.mxu0 0.0
    %1597 = vmatprep.subr.mxu0 0.0
    %1598 = vmatpush1.xpose.msra.mxu0 0.0
    %1599 = vmatprep.subr.mxu0 0.0
    %1600 = vmatpush1.xpose.msra.mxu0 0.0
    %1601 = vmatprep.subr.mxu0 0.0
    %1602 = vmatpush1.xpose.msra.mxu0 0.0
    %1603 = vmatprep.subr.mxu0 0.0
    %1604 = vmatpush1.xpose.msra.mxu0 0.0
    %1605 = vmatprep.subr.mxu0 0.0
    %1606 = vmatpush1.xpose.msra.mxu0 0.0
    %1607 = vmatprep.subr.mxu0 0.0
    %1608 = vmatpush1.xpose.msra.mxu0 0.0
    %1609 = vmatprep.subr.mxu0 0.0
    %1610 = vmatpush1.xpose.msra.mxu0 %v1577
    %1611 = vmatprep.subr.mxu0 0.0
    %1612 = vmatpush2.xpose.msra.mxu0 0.0
    %1613 = vmatprep.subr.mxu0 0.0
    %1614 = vmatpush2.xpose.msra.mxu0 0.0
    %1615 = vmatprep.subr.mxu0 0.0
    %1616 = vmatpush2.xpose.msra.mxu0 0.0
    %1617 = vmatprep.subr.mxu0 0.0
    %1618 = vmatpush2.xpose.msra.mxu0 0.0
    %1619 = vmatprep.subr.mxu0 0.0
    %1620 = vmatpush2.xpose.msra.mxu0 0.0
    %1621 = vmatprep.subr.mxu0 0.0
    %1622 = vmatpush2.xpose.msra.mxu0 0.0
    %1623 = vmatprep.subr.mxu0 0.0
    %1624 = vmatpush2.xpose.msra.mxu0 0.0
    %1625 = vmatprep.subr.mxu0 0.0
    %1626 = vmatpush2.xpose.msra.mxu0 0.0
    %1627 = vmatprep.subr.mxu0 0.0
    %1628 = vmatpush2.xpose.msra.mxu0 0.0
    %1629 = vmatprep.subr.mxu0 0.0
    %1630 = vmatpush2.xpose.msra.mxu0 0.0
    %1631 = vmatprep.subr.mxu0 0.0
    %1632 = vmatpush2.xpose.msra.mxu0 0.0
    %1633 = vmatprep.subr.mxu0 0.0
    %1634 = vmatpush2.xpose.msra.mxu0 0.0
    %1635 = vmatprep.subr.mxu0 0.0
    %1636 = vmatpush2.xpose.msra.mxu0 0.0
    %1637 = vmatprep.subr.mxu0 0.0
    %1638 = vmatpush2.xpose.msra.mxu0 0.0
    %1639 = vmatprep.subr.mxu0 0.0
    %1640 = vmatpush2.xpose.msra.mxu0 0.0
    %1641 = vmatprep.subr.mxu0 0.0
    %1642 = vmatpush2.xpose.msra.mxu0 0.0
    %1643 = vmatprep.mubr.f32.mxu0 0.0
    %1644 = vmatmul.mubr.f32.gmra.mxu0 %v1575
    %v1645 = vpop.f32.mrf.mxu0
    %v1646 = vadd.f32 0.0, %v1645
    %v1647 = vpop.f32.mrf.mxu0
    %1648 = vdwg.mxu0
    %v1649 = vmul.f32 %v1569, 0.25
    %v1650 = vmul.f32 %v1646, 0.25
    %v1651 = vadd.f32 %v1649, %v42
    %v1652 = vadd.f32 %v1650, %v42
    %v1653 = vmul.f32 %v1651, 1.442695
    %v1654 = vpow.pop %v1653
    %v1655 = vmul.f32 %v1652, 1.442695
    %v1656 = vpow.pop %v1655
    %v1657 = vsel %vm501, %v1654, 0.0
    %1658 = vadd.xlane.f32.xlu0 %v1657
    %v1659 = vpop.xlane.xlu0 %1658
    %v1660 = vsel %vm501, %v1656, 0.0
    %1661 = vadd.xlane.f32.xlu0 %v1660
    %v1662 = vpop.xlane.xlu0 %1661
    %v1663 = vrcp.pop %v1659
    %v1664 = vmul.f32 %v1654, %v1663
    %v1665 = vrcp.pop %v1662
    %v1666 = vmul.f32 %v1656, %v1665
    %1667 = vrot.lane.b32.xlu0 %v1483, 64
    %v1668 = vpop.permute.xlu0 %1667
    %v1671 = vsel %vm501, %v1664, 0
    %1673 = vmatprep.subr.mxu0 0.0
    %1674 = vmatpush1.msra.mxu0 0.0
    %1675 = vmatprep.subr.mxu0 0.0
    %1676 = vmatpush1.msra.mxu0 0.0
    %1677 = vmatprep.subr.mxu0 0.0
    %1678 = vmatpush1.msra.mxu0 0.0
    %1679 = vmatprep.subr.mxu0 0.0
    %1680 = vmatpush1.msra.mxu0 0.0
    %1681 = vmatprep.subr.mxu0 0.0
    %1682 = vmatpush1.msra.mxu0 0.0
    %1683 = vmatprep.subr.mxu0 0.0
    %1684 = vmatpush1.msra.mxu0 0.0
    %1685 = vmatprep.subr.mxu0 0.0
    %1686 = vmatpush1.msra.mxu0 0.0
    %1687 = vmatprep.subr.mxu0 0.0
    %1688 = vmatpush1.msra.mxu0 0.0
    %1689 = vmatprep.subr.mxu0 0.0
    %1690 = vmatpush1.msra.mxu0 0.0
    %1691 = vmatprep.subr.mxu0 0.0
    %1692 = vmatpush1.msra.mxu0 0.0
    %1693 = vmatprep.subr.mxu0 0.0
    %1694 = vmatpush1.msra.mxu0 0.0
    %1695 = vmatprep.subr.mxu0 0.0
    %1696 = vmatpush1.msra.mxu0 0.0
    %1697 = vmatprep.subr.mxu0 0.0
    %1698 = vmatpush1.msra.mxu0 0.0
    %1699 = vmatprep.subr.mxu0 0.0
    %1700 = vmatpush1.msra.mxu0 0.0
    %1701 = vmatprep.subr.mxu0 0.0
    %1702 = vmatpush1.msra.mxu0 0.0
    %1703 = vmatprep.subr.mxu0 0.0
    %1704 = vmatpush1.msra.mxu0 %v1668
    %1705 = vmatprep.subr.mxu0 0.0
    %1706 = vmatpush2.msra.mxu0 0.0
    %1707 = vmatprep.subr.mxu0 0.0
    %1708 = vmatpush2.msra.mxu0 0.0
    %1709 = vmatprep.subr.mxu0 0.0
    %1710 = vmatpush2.msra.mxu0 0.0
    %1711 = vmatprep.subr.mxu0 0.0
    %1712 = vmatpush2.msra.mxu0 0.0
    %1713 = vmatprep.subr.mxu0 0.0
    %1714 = vmatpush2.msra.mxu0 0.0
    %1715 = vmatprep.subr.mxu0 0.0
    %1716 = vmatpush2.msra.mxu0 0.0
    %1717 = vmatprep.subr.mxu0 0.0
    %1718 = vmatpush2.msra.mxu0 0.0
    %1719 = vmatprep.subr.mxu0 0.0
    %1720 = vmatpush2.msra.mxu0 0.0
    %1721 = vmatprep.subr.mxu0 0.0
    %1722 = vmatpush2.msra.mxu0 0.0
    %1723 = vmatprep.subr.mxu0 0.0
    %1724 = vmatpush2.msra.mxu0 0.0
    %1725 = vmatprep.subr.mxu0 0.0
    %1726 = vmatpush2.msra.mxu0 0.0
    %1727 = vmatprep.subr.mxu0 0.0
    %1728 = vmatpush2.msra.mxu0 0.0
    %1729 = vmatprep.subr.mxu0 0.0
    %1730 = vmatpush2.msra.mxu0 0.0
    %1731 = vmatprep.subr.mxu0 0.0
    %1732 = vmatpush2.msra.mxu0 0.0
    %1733 = vmatprep.subr.mxu0 0.0
    %1734 = vmatpush2.msra.mxu0 0.0
    %1735 = vmatprep.subr.mxu0 0.0
    %1736 = vmatpush2.msra.mxu0 0.0
    %1737 = vmatprep.mubr.f32.mxu0 0.0
    %1738 = vmatmul.mubr.f32.gmra.mxu0 %v1671
    %v1739 = vpop.f32.mrf.mxu0
    %v1740 = vadd.f32 0.0, %v1739
    %v1741 = vpop.f32.mrf.mxu0
    %1742 = vdwg.mxu0
    %1743 = vrot.lane.b32.xlu0 %v1484, 64
    %v1744 = vpop.permute.xlu0 %1743
    %v1747 = vsel %vm501, %v1666, 0
    %1749 = vmatprep.subr.mxu0 0.0
    %1750 = vmatpush1.msra.mxu0 0.0
    %1751 = vmatprep.subr.mxu0 0.0
    %1752 = vmatpush1.msra.mxu0 0.0
    %1753 = vmatprep.subr.mxu0 0.0
    %1754 = vmatpush1.msra.mxu0 0.0
    %1755 = vmatprep.subr.mxu0 0.0
    %1756 = vmatpush1.msra.mxu0 0.0
    %1757 = vmatprep.subr.mxu0 0.0
    %1758 = vmatpush1.msra.mxu0 0.0
    %1759 = vmatprep.subr.mxu0 0.0
    %1760 = vmatpush1.msra.mxu0 0.0
    %1761 = vmatprep.subr.mxu0 0.0
    %1762 = vmatpush1.msra.mxu0 0.0
    %1763 = vmatprep.subr.mxu0 0.0
    %1764 = vmatpush1.msra.mxu0 0.0
    %1765 = vmatprep.subr.mxu0 0.0
    %1766 = vmatpush1.msra.mxu0 0.0
    %1767 = vmatprep.subr.mxu0 0.0
    %1768 = vmatpush1.msra.mxu0 0.0
    %1769 = vmatprep.subr.mxu0 0.0
    %1770 = vmatpush1.msra.mxu0 0.0
    %1771 = vmatprep.subr.mxu0 0.0
    %1772 = vmatpush1.msra.mxu0 0.0
    %1773 = vmatprep.subr.mxu0 0.0
    %1774 = vmatpush1.msra.mxu0 0.0
    %1775 = vmatprep.subr.mxu0 0.0
    %1776 = vmatpush1.msra.mxu0 0.0
    %1777 = vmatprep.subr.mxu0 0.0
    %1778 = vmatpush1.msra.mxu0 0.0
    %1779 = vmatprep.subr.mxu0 0.0
    %1780 = vmatpush1.msra.mxu0 %v1744
    %1781 = vmatprep.subr.mxu0 0.0
    %1782 = vmatpush2.msra.mxu0 0.0
    %1783 = vmatprep.subr.mxu0 0.0
    %1784 = vmatpush2.msra.mxu0 0.0
    %1785 = vmatprep.subr.mxu0 0.0
    %1786 = vmatpush2.msra.mxu0 0.0
    %1787 = vmatprep.subr.mxu0 0.0
    %1788 = vmatpush2.msra.mxu0 0.0
    %1789 = vmatprep.subr.mxu0 0.0
    %1790 = vmatpush2.msra.mxu0 0.0
    %1791 = vmatprep.subr.mxu0 0.0
    %1792 = vmatpush2.msra.mxu0 0.0
    %1793 = vmatprep.subr.mxu0 0.0
    %1794 = vmatpush2.msra.mxu0 0.0
    %1795 = vmatprep.subr.mxu0 0.0
    %1796 = vmatpush2.msra.mxu0 0.0
    %1797 = vmatprep.subr.mxu0 0.0
    %1798 = vmatpush2.msra.mxu0 0.0
    %1799 = vmatprep.subr.mxu0 0.0
    %1800 = vmatpush2.msra.mxu0 0.0
    %1801 = vmatprep.subr.mxu0 0.0
    %1802 = vmatpush2.msra.mxu0 0.0
    %1803 = vmatprep.subr.mxu0 0.0
    %1804 = vmatpush2.msra.mxu0 0.0
    %1805 = vmatprep.subr.mxu0 0.0
    %1806 = vmatpush2.msra.mxu0 0.0
    %1807 = vmatprep.subr.mxu0 0.0
    %1808 = vmatpush2.msra.mxu0 0.0
    %1809 = vmatprep.subr.mxu0 0.0
    %1810 = vmatpush2.msra.mxu0 0.0
    %1811 = vmatprep.subr.mxu0 0.0
    %1812 = vmatpush2.msra.mxu0 0.0
    %1813 = vmatprep.mubr.f32.mxu0 0.0
    %1814 = vmatmul.mubr.f32.gmra.mxu0 %v1747
    %v1815 = vpop.f32.mrf.mxu0
    %v1816 = vadd.f32 0.0, %v1815
    %v1817 = vpop.f32.mrf.mxu0
    %1818 = vdwg.mxu0
    %v1819 = vadd.f32 %v1493, %v1740
    %v1820 = vadd.f32 %v1494, %v1816
    %1821 = vrot.lane.b32.xlu0 %v1483, 112
    %v1822 = vpop.permute.xlu0 %1821
    %1823 = vrot.lane.b32.xlu0 %v1483, 80
    %v1824 = vpop.permute.xlu0 %1823
    %v1825 = vsel %vm341, %v1822, 0
    %v1827 = vsel %vm341, %v1824, 0
    %1829 = vmatprep.subr.mxu0 0.0
    %1830 = vmatpush1.xpose.msra.mxu0 0.0
    %1831 = vmatprep.subr.mxu0 0.0
    %1832 = vmatpush1.xpose.msra.mxu0 0.0
    %1833 = vmatprep.subr.mxu0 0.0
    %1834 = vmatpush1.xpose.msra.mxu0 0.0
    %1835 = vmatprep.subr.mxu0 0.0
    %1836 = vmatpush1.xpose.msra.mxu0 0.0
    %1837 = vmatprep.subr.mxu0 0.0
    %1838 = vmatpush1.xpose.msra.mxu0 0.0
    %1839 = vmatprep.subr.mxu0 0.0
    %1840 = vmatpush1.xpose.msra.mxu0 0.0
    %1841 = vmatprep.subr.mxu0 0.0
    %1842 = vmatpush1.xpose.msra.mxu0 0.0
    %1843 = vmatprep.subr.mxu0 0.0
    %1844 = vmatpush1.xpose.msra.mxu0 0.0
    %1845 = vmatprep.subr.mxu0 0.0
    %1846 = vmatpush1.xpose.msra.mxu0 0.0
    %1847 = vmatprep.subr.mxu0 0.0
    %1848 = vmatpush1.xpose.msra.mxu0 0.0
    %1849 = vmatprep.subr.mxu0 0.0
    %1850 = vmatpush1.xpose.msra.mxu0 0.0
    %1851 = vmatprep.subr.mxu0 0.0
    %1852 = vmatpush1.xpose.msra.mxu0 0.0
    %1853 = vmatprep.subr.mxu0 0.0
    %1854 = vmatpush1.xpose.msra.mxu0 0.0
    %1855 = vmatprep.subr.mxu0 0.0
    %1856 = vmatpush1.xpose.msra.mxu0 0.0
    %1857 = vmatprep.subr.mxu0 0.0
    %1858 = vmatpush1.xpose.msra.mxu0 0.0
    %1859 = vmatprep.subr.mxu0 0.0
    %1860 = vmatpush1.xpose.msra.mxu0 %v1827
    %1861 = vmatprep.subr.mxu0 0.0
    %1862 = vmatpush2.xpose.msra.mxu0 0.0
    %1863 = vmatprep.subr.mxu0 0.0
    %1864 = vmatpush2.xpose.msra.mxu0 0.0
    %1865 = vmatprep.subr.mxu0 0.0
    %1866 = vmatpush2.xpose.msra.mxu0 0.0
    %1867 = vmatprep.subr.mxu0 0.0
    %1868 = vmatpush2.xpose.msra.mxu0 0.0
    %1869 = vmatprep.subr.mxu0 0.0
    %1870 = vmatpush2.xpose.msra.mxu0 0.0
    %1871 = vmatprep.subr.mxu0 0.0
    %1872 = vmatpush2.xpose.msra.mxu0 0.0
    %1873 = vmatprep.subr.mxu0 0.0
    %1874 = vmatpush2.xpose.msra.mxu0 0.0
    %1875 = vmatprep.subr.mxu0 0.0
    %1876 = vmatpush2.xpose.msra.mxu0 0.0
    %1877 = vmatprep.subr.mxu0 0.0
    %1878 = vmatpush2.xpose.msra.mxu0 0.0
    %1879 = vmatprep.subr.mxu0 0.0
    %1880 = vmatpush2.xpose.msra.mxu0 0.0
    %1881 = vmatprep.subr.mxu0 0.0
    %1882 = vmatpush2.xpose.msra.mxu0 0.0
    %1883 = vmatprep.subr.mxu0 0.0
    %1884 = vmatpush2.xpose.msra.mxu0 0.0
    %1885 = vmatprep.subr.mxu0 0.0
    %1886 = vmatpush2.xpose.msra.mxu0 0.0
    %1887 = vmatprep.subr.mxu0 0.0
    %1888 = vmatpush2.xpose.msra.mxu0 0.0
    %1889 = vmatprep.subr.mxu0 0.0
    %1890 = vmatpush2.xpose.msra.mxu0 0.0
    %1891 = vmatprep.subr.mxu0 0.0
    %1892 = vmatpush2.xpose.msra.mxu0 0.0
    %1893 = vmatprep.mubr.f32.mxu0 0.0
    %1894 = vmatmul.mubr.f32.gmra.mxu0 %v1825
    %v1895 = vpop.f32.mrf.mxu0
    %v1896 = vadd.f32 0.0, %v1895
    %v1897 = vpop.f32.mrf.mxu0
    %1898 = vdwg.mxu0
    %1899 = vrot.lane.b32.xlu0 %v1484, 112
    %v1900 = vpop.permute.xlu0 %1899
    %1901 = vrot.lane.b32.xlu0 %v1484, 80
    %v1902 = vpop.permute.xlu0 %1901
    %v1903 = vsel %vm341, %v1900, 0
    %v1905 = vsel %vm341, %v1902, 0
    %1907 = vmatprep.subr.mxu0 0.0
    %1908 = vmatpush1.xpose.msra.mxu0 0.0
    %1909 = vmatprep.subr.mxu0 0.0
    %1910 = vmatpush1.xpose.msra.mxu0 0.0
    %1911 = vmatprep.subr.mxu0 0.0
    %1912 = vmatpush1.xpose.msra.mxu0 0.0
    %1913 = vmatprep.subr.mxu0 0.0
    %1914 = vmatpush1.xpose.msra.mxu0 0.0
    %1915 = vmatprep.subr.mxu0 0.0
    %1916 = vmatpush1.xpose.msra.mxu0 0.0
    %1917 = vmatprep.subr.mxu0 0.0
    %1918 = vmatpush1.xpose.msra.mxu0 0.0
    %1919 = vmatprep.subr.mxu0 0.0
    %1920 = vmatpush1.xpose.msra.mxu0 0.0
    %1921 = vmatprep.subr.mxu0 0.0
    %1922 = vmatpush1.xpose.msra.mxu0 0.0
    %1923 = vmatprep.subr.mxu0 0.0
    %1924 = vmatpush1.xpose.msra.mxu0 0.0
    %1925 = vmatprep.subr.mxu0 0.0
    %1926 = vmatpush1.xpose.msra.mxu0 0.0
    %1927 = vmatprep.subr.mxu0 0.0
    %1928 = vmatpush1.xpose.msra.mxu0 0.0
    %1929 = vmatprep.subr.mxu0 0.0
    %1930 = vmatpush1.xpose.msra.mxu0 0.0
    %1931 = vmatprep.subr.mxu0 0.0
    %1932 = vmatpush1.xpose.msra.mxu0 0.0
    %1933 = vmatprep.subr.mxu0 0.0
    %1934 = vmatpush1.xpose.msra.mxu0 0.0
    %1935 = vmatprep.subr.mxu0 0.0
    %1936 = vmatpush1.xpose.msra.mxu0 0.0
    %1937 = vmatprep.subr.mxu0 0.0
    %1938 = vmatpush1.xpose.msra.mxu0 %v1905
    %1939 = vmatprep.subr.mxu0 0.0
    %1940 = vmatpush2.xpose.msra.mxu0 0.0
    %1941 = vmatprep.subr.mxu0 0.0
    %1942 = vmatpush2.xpose.msra.mxu0 0.0
    %1943 = vmatprep.subr.mxu0 0.0
    %1944 = vmatpush2.xpose.msra.mxu0 0.0
    %1945 = vmatprep.subr.mxu0 0.0
    %1946 = vmatpush2.xpose.msra.mxu0 0.0
    %1947 = vmatprep.subr.mxu0 0.0
    %1948 = vmatpush2.xpose.msra.mxu0 0.0
    %1949 = vmatprep.subr.mxu0 0.0
    %1950 = vmatpush2.xpose.msra.mxu0 0.0
    %1951 = vmatprep.subr.mxu0 0.0
    %1952 = vmatpush2.xpose.msra.mxu0 0.0
    %1953 = vmatprep.subr.mxu0 0.0
    %1954 = vmatpush2.xpose.msra.mxu0 0.0
    %1955 = vmatprep.subr.mxu0 0.0
    %1956 = vmatpush2.xpose.msra.mxu0 0.0
    %1957 = vmatprep.subr.mxu0 0.0
    %1958 = vmatpush2.xpose.msra.mxu0 0.0
    %1959 = vmatprep.subr.mxu0 0.0
    %1960 = vmatpush2.xpose.msra.mxu0 0.0
    %1961 = vmatprep.subr.mxu0 0.0
    %1962 = vmatpush2.xpose.msra.mxu0 0.0
    %1963 = vmatprep.subr.mxu0 0.0
    %1964 = vmatpush2.xpose.msra.mxu0 0.0
    %1965 = vmatprep.subr.mxu0 0.0
    %1966 = vmatpush2.xpose.msra.mxu0 0.0
    %1967 = vmatprep.subr.mxu0 0.0
    %1968 = vmatpush2.xpose.msra.mxu0 0.0
    %1969 = vmatprep.subr.mxu0 0.0
    %1970 = vmatpush2.xpose.msra.mxu0 0.0
    %1971 = vmatprep.mubr.f32.mxu0 0.0
    %1972 = vmatmul.mubr.f32.gmra.mxu0 %v1903
    %v1973 = vpop.f32.mrf.mxu0
    %v1974 = vadd.f32 0.0, %v1973
    %v1975 = vpop.f32.mrf.mxu0
    %1976 = vdwg.mxu0
    %v1977 = vmul.f32 %v1896, 0.25
    %v1978 = vmul.f32 %v1974, 0.25
    %v1979 = vadd.f32 %v1977, %v42
    %v1980 = vadd.f32 %v1978, %v42
    %v1981 = vmul.f32 %v1979, 1.442695
    %v1982 = vpow.pop %v1981
    %v1983 = vmul.f32 %v1980, 1.442695
    %v1984 = vpow.pop %v1983
    %v1985 = vsel %vm501, %v1982, 0.0
    %1986 = vadd.xlane.f32.xlu0 %v1985
    %v1987 = vpop.xlane.xlu0 %1986
    %v1988 = vsel %vm501, %v1984, 0.0
    %1989 = vadd.xlane.f32.xlu0 %v1988
    %v1990 = vpop.xlane.xlu0 %1989
    %v1991 = vrcp.pop %v1987
    %v1992 = vmul.f32 %v1982, %v1991
    %v1993 = vrcp.pop %v1990
    %v1994 = vmul.f32 %v1984, %v1993
    %1995 = vrot.lane.b32.xlu0 %v1483, 32
    %v1996 = vpop.permute.xlu0 %1995
    %v1999 = vsel %vm501, %v1992, 0
    %2001 = vmatprep.subr.mxu0 0.0
    %2002 = vmatpush1.msra.mxu0 0.0
    %2003 = vmatprep.subr.mxu0 0.0
    %2004 = vmatpush1.msra.mxu0 0.0
    %2005 = vmatprep.subr.mxu0 0.0
    %2006 = vmatpush1.msra.mxu0 0.0
    %2007 = vmatprep.subr.mxu0 0.0
    %2008 = vmatpush1.msra.mxu0 0.0
    %2009 = vmatprep.subr.mxu0 0.0
    %2010 = vmatpush1.msra.mxu0 0.0
    %2011 = vmatprep.subr.mxu0 0.0
    %2012 = vmatpush1.msra.mxu0 0.0
    %2013 = vmatprep.subr.mxu0 0.0
    %2014 = vmatpush1.msra.mxu0 0.0
    %2015 = vmatprep.subr.mxu0 0.0
    %2016 = vmatpush1.msra.mxu0 0.0
    %2017 = vmatprep.subr.mxu0 0.0
    %2018 = vmatpush1.msra.mxu0 0.0
    %2019 = vmatprep.subr.mxu0 0.0
    %2020 = vmatpush1.msra.mxu0 0.0
    %2021 = vmatprep.subr.mxu0 0.0
    %2022 = vmatpush1.msra.mxu0 0.0
    %2023 = vmatprep.subr.mxu0 0.0
    %2024 = vmatpush1.msra.mxu0 0.0
    %2025 = vmatprep.subr.mxu0 0.0
    %2026 = vmatpush1.msra.mxu0 0.0
    %2027 = vmatprep.subr.mxu0 0.0
    %2028 = vmatpush1.msra.mxu0 0.0
    %2029 = vmatprep.subr.mxu0 0.0
    %2030 = vmatpush1.msra.mxu0 0.0
    %2031 = vmatprep.subr.mxu0 0.0
    %2032 = vmatpush1.msra.mxu0 %v1996
    %2033 = vmatprep.subr.mxu0 0.0
    %2034 = vmatpush2.msra.mxu0 0.0
    %2035 = vmatprep.subr.mxu0 0.0
    %2036 = vmatpush2.msra.mxu0 0.0
    %2037 = vmatprep.subr.mxu0 0.0
    %2038 = vmatpush2.msra.mxu0 0.0
    %2039 = vmatprep.subr.mxu0 0.0
    %2040 = vmatpush2.msra.mxu0 0.0
    %2041 = vmatprep.subr.mxu0 0.0
    %2042 = vmatpush2.msra.mxu0 0.0
    %2043 = vmatprep.subr.mxu0 0.0
    %2044 = vmatpush2.msra.mxu0 0.0
    %2045 = vmatprep.subr.mxu0 0.0
    %2046 = vmatpush2.msra.mxu0 0.0
    %2047 = vmatprep.subr.mxu0 0.0
    %2048 = vmatpush2.msra.mxu0 0.0
    %2049 = vmatprep.subr.mxu0 0.0
    %2050 = vmatpush2.msra.mxu0 0.0
    %2051 = vmatprep.subr.mxu0 0.0
    %2052 = vmatpush2.msra.mxu0 0.0
    %2053 = vmatprep.subr.mxu0 0.0
    %2054 = vmatpush2.msra.mxu0 0.0
    %2055 = vmatprep.subr.mxu0 0.0
    %2056 = vmatpush2.msra.mxu0 0.0
    %2057 = vmatprep.subr.mxu0 0.0
    %2058 = vmatpush2.msra.mxu0 0.0
    %2059 = vmatprep.subr.mxu0 0.0
    %2060 = vmatpush2.msra.mxu0 0.0
    %2061 = vmatprep.subr.mxu0 0.0
    %2062 = vmatpush2.msra.mxu0 0.0
    %2063 = vmatprep.subr.mxu0 0.0
    %2064 = vmatpush2.msra.mxu0 0.0
    %2065 = vmatprep.mubr.f32.mxu0 0.0
    %2066 = vmatmul.mubr.f32.gmra.mxu0 %v1999
    %v2067 = vpop.f32.mrf.mxu0
    %v2068 = vadd.f32 0.0, %v2067
    %v2069 = vpop.f32.mrf.mxu0
    %2070 = vdwg.mxu0
    %2071 = vrot.lane.b32.xlu0 %v1484, 32
    %v2072 = vpop.permute.xlu0 %2071
    %v2075 = vsel %vm501, %v1994, 0
    %2077 = vmatprep.subr.mxu0 0.0
    %2078 = vmatpush1.msra.mxu0 0.0
    %2079 = vmatprep.subr.mxu0 0.0
    %2080 = vmatpush1.msra.mxu0 0.0
    %2081 = vmatprep.subr.mxu0 0.0
    %2082 = vmatpush1.msra.mxu0 0.0
    %2083 = vmatprep.subr.mxu0 0.0
    %2084 = vmatpush1.msra.mxu0 0.0
    %2085 = vmatprep.subr.mxu0 0.0
    %2086 = vmatpush1.msra.mxu0 0.0
    %2087 = vmatprep.subr.mxu0 0.0
    %2088 = vmatpush1.msra.mxu0 0.0
    %2089 = vmatprep.subr.mxu0 0.0
    %2090 = vmatpush1.msra.mxu0 0.0
    %2091 = vmatprep.subr.mxu0 0.0
    %2092 = vmatpush1.msra.mxu0 0.0
    %2093 = vmatprep.subr.mxu0 0.0
    %2094 = vmatpush1.msra.mxu0 0.0
    %2095 = vmatprep.subr.mxu0 0.0
    %2096 = vmatpush1.msra.mxu0 0.0
    %2097 = vmatprep.subr.mxu0 0.0
    %2098 = vmatpush1.msra.mxu0 0.0
    %2099 = vmatprep.subr.mxu0 0.0
    %2100 = vmatpush1.msra.mxu0 0.0
    %2101 = vmatprep.subr.mxu0 0.0
    %2102 = vmatpush1.msra.mxu0 0.0
    %2103 = vmatprep.subr.mxu0 0.0
    %2104 = vmatpush1.msra.mxu0 0.0
    %2105 = vmatprep.subr.mxu0 0.0
    %2106 = vmatpush1.msra.mxu0 0.0
    %2107 = vmatprep.subr.mxu0 0.0
    %2108 = vmatpush1.msra.mxu0 %v2072
    %2109 = vmatprep.subr.mxu0 0.0
    %2110 = vmatpush2.msra.mxu0 0.0
    %2111 = vmatprep.subr.mxu0 0.0
    %2112 = vmatpush2.msra.mxu0 0.0
    %2113 = vmatprep.subr.mxu0 0.0
    %2114 = vmatpush2.msra.mxu0 0.0
    %2115 = vmatprep.subr.mxu0 0.0
    %2116 = vmatpush2.msra.mxu0 0.0
    %2117 = vmatprep.subr.mxu0 0.0
    %2118 = vmatpush2.msra.mxu0 0.0
    %2119 = vmatprep.subr.mxu0 0.0
    %2120 = vmatpush2.msra.mxu0 0.0
    %2121 = vmatprep.subr.mxu0 0.0
    %2122 = vmatpush2.msra.mxu0 0.0
    %2123 = vmatprep.subr.mxu0 0.0
    %2124 = vmatpush2.msra.mxu0 0.0
    %2125 = vmatprep.subr.mxu0 0.0
    %2126 = vmatpush2.msra.mxu0 0.0
    %2127 = vmatprep.subr.mxu0 0.0
    %2128 = vmatpush2.msra.mxu0 0.0
    %2129 = vmatprep.subr.mxu0 0.0
    %2130 = vmatpush2.msra.mxu0 0.0
    %2131 = vmatprep.subr.mxu0 0.0
    %2132 = vmatpush2.msra.mxu0 0.0
    %2133 = vmatprep.subr.mxu0 0.0
    %2134 = vmatpush2.msra.mxu0 0.0
    %2135 = vmatprep.subr.mxu0 0.0
    %2136 = vmatpush2.msra.mxu0 0.0
    %2137 = vmatprep.subr.mxu0 0.0
    %2138 = vmatpush2.msra.mxu0 0.0
    %2139 = vmatprep.subr.mxu0 0.0
    %2140 = vmatpush2.msra.mxu0 0.0
    %2141 = vmatprep.mubr.f32.mxu0 0.0
    %2142 = vmatmul.mubr.f32.gmra.mxu0 %v2075
    %v2143 = vpop.f32.mrf.mxu0
    %v2144 = vadd.f32 0.0, %v2143
    %v2145 = vpop.f32.mrf.mxu0
    %2146 = vdwg.mxu0
    %v2147 = vadd.f32 %v1819, %v2068
    %v2148 = vadd.f32 %v1820, %v2144
    %v2149 = vsel %vm67, %v2147, 0.0
    %2150 = vadd.xlane.f32.xlu0 %v2149
    %v2151 = vpop.xlane.xlu0 %2150
    %v2152 = vsel %vm67, %v2148, 0.0
    %2153 = vadd.xlane.f32.xlu0 %v2152
    %v2154 = vpop.xlane.xlu0 %2153
    %v2155 = vmul.f32 %v2151, %v74
    %v2156 = vmul.f32 %v2154, %v74
    %v2157 = vsub.f32 %v2147, %v2155
    %v2158 = vsub.f32 %v2148, %v2156
    %v2159 = vmul.f32 %v2157, %v2157
    %v2160 = vmul.f32 %v2158, %v2158
    %v2161 = vsel %vm67, %v2159, 0.0
    %2162 = vadd.xlane.f32.xlu0 %v2161
    %v2163 = vpop.xlane.xlu0 %2162
    %v2164 = vsel %vm67, %v2160, 0.0
    %2165 = vadd.xlane.f32.xlu0 %v2164
    %v2166 = vpop.xlane.xlu0 %2165
    %v2167 = vmul.f32 %v2163, %v74
    %v2168 = vmul.f32 %v2166, %v74
    %v2169 = vadd.f32 %v2167, 1e-12
    %v2170 = vadd.f32 %v2168, 1e-12
    %v2171 = vrsqrt.pop %v2169
    %v2172 = vrsqrt.pop %v2170
    %v2173 = vmul.f32 %v2157, %v2171
    %v2174 = vmul.f32 %v2158, %v2172
    %v2175 = vmul.f32 %v2173, %v1488
    %v2176 = vmul.f32 %v2174, %v1488
    %2177 = vrot.lane.b32.xlu0 %v1488, 96
    %v2178 = vpop.permute.xlu0 %2177
    %v2180 = vadd.f32 %v2175, %v2178
    %v2181 = vadd.f32 %v2176, %v2178
    %v2182 = vlaneseq
    %v2183 = vshrl.u32 %v2182, 7
    %v2184 = vsub.s32 0, %v2183
    %v2185 = vrot.slane %v1248, %v2184
    %v2187 = vsel %vm67, %v2180, 0
    %v2190 = vsel %vm67, %v2181, 0
    %2192 = vmatprep.subr.mxu0 0.0
    %2193 = vmatpush1.msra.mxu0 0.0
    %2194 = vmatprep.subr.mxu0 0.0
    %2195 = vmatpush1.msra.mxu0 0.0
    %2196 = vmatprep.subr.mxu0 0.0
    %2197 = vmatpush1.msra.mxu0 0.0
    %2198 = vmatprep.subr.mxu0 0.0
    %2199 = vmatpush1.msra.mxu0 0.0
    %2200 = vmatprep.subr.mxu0 0.0
    %2201 = vmatpush1.msra.mxu0 0.0
    %2202 = vmatprep.subr.mxu0 0.0
    %2203 = vmatpush1.msra.mxu0 0.0
    %2204 = vmatprep.subr.mxu0 0.0
    %2205 = vmatpush1.msra.mxu0 0.0
    %2206 = vmatprep.subr.mxu0 0.0
    %2207 = vmatpush1.msra.mxu0 0.0
    %2208 = vmatprep.subr.mxu0 0.0
    %2209 = vmatpush1.msra.mxu0 0.0
    %2210 = vmatprep.subr.mxu0 0.0
    %2211 = vmatpush1.msra.mxu0 0.0
    %2212 = vmatprep.subr.mxu0 0.0
    %2213 = vmatpush1.msra.mxu0 0.0
    %2214 = vmatprep.subr.mxu0 0.0
    %2215 = vmatpush1.msra.mxu0 0.0
    %2216 = vmatprep.subr.mxu0 0.0
    %2217 = vmatpush1.msra.mxu0 %v1260
    %2218 = vmatprep.subr.mxu0 0.0
    %2219 = vmatpush1.msra.mxu0 %v1259
    %2220 = vmatprep.subr.mxu0 0.0
    %2221 = vmatpush1.msra.mxu0 %v1258
    %2222 = vmatprep.subr.mxu0 0.0
    %2223 = vmatpush1.msra.mxu0 %v1257
    %2224 = vmatprep.subr.mxu0 0.0
    %2225 = vmatpush2.msra.mxu0 0.0
    %2226 = vmatprep.subr.mxu0 0.0
    %2227 = vmatpush2.msra.mxu0 0.0
    %2228 = vmatprep.subr.mxu0 0.0
    %2229 = vmatpush2.msra.mxu0 0.0
    %2230 = vmatprep.subr.mxu0 0.0
    %2231 = vmatpush2.msra.mxu0 0.0
    %2232 = vmatprep.subr.mxu0 0.0
    %2233 = vmatpush2.msra.mxu0 0.0
    %2234 = vmatprep.subr.mxu0 0.0
    %2235 = vmatpush2.msra.mxu0 0.0
    %2236 = vmatprep.subr.mxu0 0.0
    %2237 = vmatpush2.msra.mxu0 0.0
    %2238 = vmatprep.subr.mxu0 0.0
    %2239 = vmatpush2.msra.mxu0 0.0
    %2240 = vmatprep.subr.mxu0 0.0
    %2241 = vmatpush2.msra.mxu0 0.0
    %2242 = vmatprep.subr.mxu0 0.0
    %2243 = vmatpush2.msra.mxu0 0.0
    %2244 = vmatprep.subr.mxu0 0.0
    %2245 = vmatpush2.msra.mxu0 0.0
    %2246 = vmatprep.subr.mxu0 0.0
    %2247 = vmatpush2.msra.mxu0 0.0
    %2248 = vmatprep.subr.mxu0 0.0
    %2249 = vmatpush2.msra.mxu0 0.0
    %2250 = vmatprep.subr.mxu0 0.0
    %2251 = vmatpush2.msra.mxu0 0.0
    %2252 = vmatprep.subr.mxu0 0.0
    %2253 = vmatpush2.msra.mxu0 0.0
    %2254 = vmatprep.subr.mxu0 0.0
    %2255 = vmatpush2.msra.mxu0 0.0
    %2256 = vmatprep.mubr.f32.mxu0 0.0
    %2257 = vmatmul.mubr.f32.gmra.mxu0 %v2187
    %v2258 = vpop.f32.mrf.mxu0
    %v2259 = vadd.f32 %v2185, %v2258
    %v2260 = vpop.f32.mrf.mxu0
    %2261 = vmatprep.mubr.f32.mxu0 0.0
    %2262 = vmatmul.mubr.f32.gmra.mxu0 %v2190
    %v2263 = vpop.f32.mrf.mxu0
    %v2264 = vadd.f32 %v2185, %v2263
    %v2265 = vpop.f32.mrf.mxu0
    %2266 = vdwg.mxu0
    %v2267 = vmul.f32 %v2259, 0.5
    %v2268 = vmul.f32 %v2264, 0.5
    %v2269 = vmul.f32 %v2259, 0.70710677
    %v2270 = vmul.f32 %v2264, 0.70710677
    %v2271 = verf.f32.pop %v2269
    %v2272 = verf.f32.pop %v2270
    %v2273 = vadd.f32 %v2271, 1.0
    %v2274 = vadd.f32 %v2272, 1.0
    %v2275 = vmul.f32 %v2267, %v2273
    %v2276 = vmul.f32 %v2268, %v2274
    %2277 = vrot.lane.b32.xlu0 %v1488, 32
    %v2278 = vpop.permute.xlu0 %2277
    %v2281 = vsel %vm1158, %v2275, 0
    %v2284 = vsel %vm1158, %v2276, 0
    %2286 = vmatprep.subr.mxu0 0.0
    %2287 = vmatpush1.msra.mxu0 0.0
    %2288 = vmatprep.subr.mxu0 0.0
    %2289 = vmatpush1.msra.mxu0 0.0
    %2290 = vmatprep.subr.mxu0 0.0
    %2291 = vmatpush1.msra.mxu0 0.0
    %2292 = vmatprep.subr.mxu0 0.0
    %2293 = vmatpush1.msra.mxu0 0.0
    %2294 = vmatprep.subr.mxu0 0.0
    %2295 = vmatpush1.msra.mxu0 0.0
    %2296 = vmatprep.subr.mxu0 0.0
    %2297 = vmatpush1.msra.mxu0 0.0
    %2298 = vmatprep.subr.mxu0 0.0
    %2299 = vmatpush1.msra.mxu0 0.0
    %2300 = vmatprep.subr.mxu0 0.0
    %2301 = vmatpush1.msra.mxu0 0.0
    %2302 = vmatprep.subr.mxu0 0.0
    %2303 = vmatpush1.msra.mxu0 %v1268
    %2304 = vmatprep.subr.mxu0 0.0
    %2305 = vmatpush1.msra.mxu0 %v1267
    %2306 = vmatprep.subr.mxu0 0.0
    %2307 = vmatpush1.msra.mxu0 %v1266
    %2308 = vmatprep.subr.mxu0 0.0
    %2309 = vmatpush1.msra.mxu0 %v1265
    %2310 = vmatprep.subr.mxu0 0.0
    %2311 = vmatpush1.msra.mxu0 %v1264
    %2312 = vmatprep.subr.mxu0 0.0
    %2313 = vmatpush1.msra.mxu0 %v1263
    %2314 = vmatprep.subr.mxu0 0.0
    %2315 = vmatpush1.msra.mxu0 %v1262
    %2316 = vmatprep.subr.mxu0 0.0
    %2317 = vmatpush1.msra.mxu0 %v1261
    %2318 = vmatprep.subr.mxu0 0.0
    %2319 = vmatpush2.msra.mxu0 0.0
    %2320 = vmatprep.subr.mxu0 0.0
    %2321 = vmatpush2.msra.mxu0 0.0
    %2322 = vmatprep.subr.mxu0 0.0
    %2323 = vmatpush2.msra.mxu0 0.0
    %2324 = vmatprep.subr.mxu0 0.0
    %2325 = vmatpush2.msra.mxu0 0.0
    %2326 = vmatprep.subr.mxu0 0.0
    %2327 = vmatpush2.msra.mxu0 0.0
    %2328 = vmatprep.subr.mxu0 0.0
    %2329 = vmatpush2.msra.mxu0 0.0
    %2330 = vmatprep.subr.mxu0 0.0
    %2331 = vmatpush2.msra.mxu0 0.0
    %2332 = vmatprep.subr.mxu0 0.0
    %2333 = vmatpush2.msra.mxu0 0.0
    %2334 = vmatprep.subr.mxu0 0.0
    %2335 = vmatpush2.msra.mxu0 0.0
    %2336 = vmatprep.subr.mxu0 0.0
    %2337 = vmatpush2.msra.mxu0 0.0
    %2338 = vmatprep.subr.mxu0 0.0
    %2339 = vmatpush2.msra.mxu0 0.0
    %2340 = vmatprep.subr.mxu0 0.0
    %2341 = vmatpush2.msra.mxu0 0.0
    %2342 = vmatprep.subr.mxu0 0.0
    %2343 = vmatpush2.msra.mxu0 0.0
    %2344 = vmatprep.subr.mxu0 0.0
    %2345 = vmatpush2.msra.mxu0 0.0
    %2346 = vmatprep.subr.mxu0 0.0
    %2347 = vmatpush2.msra.mxu0 0.0
    %2348 = vmatprep.subr.mxu0 0.0
    %2349 = vmatpush2.msra.mxu0 0.0
    %2350 = vmatprep.mubr.f32.mxu0 0.0
    %2351 = vmatmul.mubr.f32.gmra.mxu0 %v2281
    %v2352 = vpop.f32.mrf.mxu0
    %v2353 = vadd.f32 %v2278, %v2352
    %v2354 = vpop.f32.mrf.mxu0
    %2355 = vmatprep.mubr.f32.mxu0 0.0
    %2356 = vmatmul.mubr.f32.gmra.mxu0 %v2284
    %v2357 = vpop.f32.mrf.mxu0
    %v2358 = vadd.f32 %v2278, %v2357
    %v2359 = vpop.f32.mrf.mxu0
    %2360 = vdwg.mxu0
    %v2361 = vadd.f32 %v2353, %v2180
    %v2362 = vadd.f32 %v2358, %v2181
    %2363 = vst.msk [vmem:[#allocation7] sm:$0xff] %vm67, %v2361
    %2364 = vst.msk [vmem:[#allocation7 + $0x8] sm:$0xff] %vm67, %v2362
    // Predicated region
    $region18: #{tpu_custom_call.1} parent=1 // pred_check
      _
    $region19: #{tpu_custom_call.1} parent=1 // pred_check_branch
      %2366 = sbr.rel (0) target = $region21
    $region20: #{tpu_custom_call.1} parent=1 // pred_region
      %s2368 = ssub.s32 256, 256
      %2369 = vsyncadd [#allocation4], %s2368
      %s2370 = sshll.u32 [#allocation7], 4
      %s2371 = int_to_ptr.vmem [resolvable:$true] %s2370
      %2376 = dma.vmem_to_hbm [thread:$0]  %s2371, 256, %s2, [#allocation4], 128, 128, 8
    $region21: #{tpu_custom_call.1} parent=1 // pred_fallthru
      _
    // Predicated region
    $region22: #{tpu_custom_call.1} parent=1 // pred_check
      _
    $region23: #{tpu_custom_call.1} parent=1 // pred_check_branch
      %2378 = sbr.rel (0) target = $region25
    $region24: #{tpu_custom_call.1} parent=1 // pred_region
      %2379 = dma.done [#allocation4], 256
    $region25: #{tpu_custom_call.1} parent=1 // pred_fallthru
      _
    %2380 = vsyncpa [#allocation3], 1
    %2381 = vsyncpa [#allocation6], 1
    %2382 = vsyncpa [#allocation4], 1

</llo_original>
